<compile_context>
chip_gen: v6e
topology: v6e:2x2x1
jax: 0.10.0
libtpu: 0.0.40
codegen_flags: <defaults>
</compile_context>

<pallas_src>
import numpy as np
import jax
import jax.numpy as jnp
from jax import lax
from jax.experimental import pallas as pl
from jax.experimental.pallas import tpu as pltpu


def _round_up(x, m):
    return (x + m - 1) // m * m


def _cdiv(a, b):
    return -(-a // b)


def _pick_time_tile(t_out, batch):
    """Lane-dense (multiple-of-128) output time tile.

    * minimise zero-padding waste (T_out just above a tile must not ~2x work)
    * prefer >= 256 wide tiles when the sequence allows (HBM efficiency)
    * ensure >= 2 parallel grid steps so v7x megacore has work on both cores.
    """
    if t_out <= 256:
        tile = _round_up(max(t_out, 1), 128)
    else:
        tile = min((512, 384, 256),
                   key=lambda t: (_round_up(t_out, t) - t_out, -t))
    if batch * _cdiv(t_out, tile) < 2 and tile > 128:
        tile = max(128, _round_up(_cdiv(t_out, 2), 128))
    return tile


def conv1d_glu_layer(x, w, b, *, c_valid, stride=2, out_dtype=jnp.bfloat16):
    """One Conv1d(stride=2, padding=K//2) + GLU layer.

    x : (B, C_phys, T_in)  activation; only the first `c_valid` channels are
        meaningful, the rest (alignment padding carried from the previous
        layer) are exact zeros.
    w : (C_out, c_valid, K);  b: (C_out,)
    Returns (y, C_half): y is (B, C_half_pad, T_out) with channels >= C_half
    exactly zero (padding carried to the next layer).
    """
    assert stride == 2, "specialised for the module's stride-2 convolutions"
    B, C_phys, T_in = x.shape
    C_out, wc_in, K = w.shape
    assert wc_in == c_valid and C_out % 2 == 0
    pad = K // 2
    C_half = C_out // 2
    T_out = (T_in + 2 * pad - K) // stride + 1

    C_half_pad = _round_up(C_half, 16)         # bf16 sublane packing (ok for f32 too)
    C_in_pad = _round_up(C_phys + 1, 16)       # +1: all-ones bias channel (even phase)
    ones_col = C_phys                          # channel index carrying the folded bias

    T_TILE = _pick_time_tile(T_out, B)
    n_t = _cdiv(T_out, T_TILE)
    T_pad = n_t * T_TILE
    H = _round_up(max((K - 1) // 2, 1), 8)     # halo columns per phase window
    W = T_TILE + H                             # per-tile window width (full-dim block)
    L_ph = T_pad + H                           # per-phase source length

    # --- even/odd phase windows: the only wrapper-side materialisation ------
    # (~1x the raw activation instead of the ~2.5x full im2col matrix)
    right = 2 * L_ph - pad - T_in
    assert right >= 0, (T_in, K, stride, T_out, T_pad)
    xp = jnp.pad(x.astype(jnp.bfloat16), ((0, 0), (0, 0), (pad, right)))
    x_e = xp[:, :, 0:2 * L_ph:2]                       # taps 0,2,4,...
    x_o = xp[:, :, 1:2 * L_ph:2]                       # taps 1,3,...
    ones = jnp.ones((B, 1, L_ph), jnp.bfloat16)        # bias rides here (tap 0)
    zpe = jnp.zeros((B, C_in_pad - C_phys - 1, L_ph), jnp.bfloat16)
    zpo = jnp.zeros((B, C_in_pad - C_phys, L_ph), jnp.bfloat16)
    phases = jnp.concatenate([x_e, ones, zpe, x_o, zpo], axis=1)   # (B, 2*C_in_pad, L_ph)
    win = jnp.stack([phases[:, :, t * T_TILE:t * T_TILE + W] for t in range(n_t)],
                    axis=1).reshape(B * n_t, 2 * C_in_pad, W)

    # --- weights: GLU halves stacked on output channels, taps on a leading
    #     axis, bias folded into tap 0 via the ones channel --------------------
    def _half(wh, bh):
        wt = jnp.transpose(wh, (2, 0, 1))                              # (K, C_half, c_valid)
        wt = jnp.pad(wt, ((0, 0), (0, C_half_pad - C_half), (0, C_in_pad - c_valid)))
        return wt.at[0, :C_half, ones_col].set(bh)
    w_taps = jnp.concatenate([_half(w[:C_half], b[:C_half]),
                              _half(w[C_half:], b[C_half:])],
                             axis=1).astype(jnp.bfloat16)              # (K, 2*C_half_pad, C_in_pad)

    # --- kernel: K per-tap MXU matmuls (taps = static lane-offset slices of
    #     the phase window), f32 accumulate, fused GLU, lane-dense store ------
    def kernel(x_ref, w_ref, o_ref):
        acc = None
        for j in range(K):
            off = j // 2
            base = (j % 2) * C_in_pad
            tap = x_ref[base:base + C_in_pad, off:off + T_TILE]        # (C_in_pad, T_TILE)
            d = jnp.dot(w_ref[j], tap, preferred_element_type=jnp.float32)
            acc = d if acc is None else acc + d
        glu = acc[:C_half_pad] * jax.nn.sigmoid(acc[C_half_pad:])
        o_ref[...] = glu.astype(o_ref.dtype)

    # --- VMEM budget + advisory cost ----------------------------------------
    win_bytes = 2 * C_in_pad * W * 2
    w_bytes = K * 2 * C_half_pad * C_in_pad * 2
    out_bytes = C_half_pad * T_TILE * jnp.dtype(out_dtype).itemsize
    acc_bytes = 2 * C_half_pad * T_TILE * 4
    est = 2 * 2 * win_bytes + 2 * out_bytes + 2 * w_bytes + 2 * acc_bytes
    vmem_limit = int(min(48 * 2**20, max(16 * 2**20, 2 * est)))
    cost = pl.CostEstimate(
        flops=int(2 * B * n_t * K * (2 * C_half_pad) * C_in_pad * T_TILE),
        transcendentals=int(B * n_t * C_half_pad * T_TILE),
        bytes_accessed=int(win.size * 2 + w_taps.size * 2
                           + B * C_half_pad * T_pad * jnp.dtype(out_dtype).itemsize),
    )

    def _call(single_buffer_weights):
        w_kwargs = ({"pipeline_mode": pl.Buffered(1)}
                    if single_buffer_weights else {})
        return pl.pallas_call(
            kernel,
            out_shape=jax.ShapeDtypeStruct((B, C_half_pad, T_pad), out_dtype),
            grid=(B, n_t),
            in_specs=[
                pl.BlockSpec((None, 2 * C_in_pad, W),
                             lambda bi, ti: (bi * n_t + ti, 0, 0)),
                pl.BlockSpec((K, 2 * C_half_pad, C_in_pad),
                             lambda bi, ti: (0, 0, 0), **w_kwargs),
            ],
            out_specs=pl.BlockSpec((None, C_half_pad, T_TILE),
                                   lambda bi, ti: (bi, 0, ti)),
            compiler_params=pltpu.CompilerParams(
                dimension_semantics=("parallel", "parallel"),
                vmem_limit_bytes=vmem_limit),
            cost_estimate=cost,
        )(win, w_taps)

    try:
        out = _call(True)      # weights single-buffered (constant index_map)
    except Exception:          # pl.Buffered(1) unsupported -> default buffering
        out = _call(False)

    # Padded time columns hold bias-only GLU values -> must be dropped before
    # the next layer.  Channel padding (exact zeros) is carried forward.
    return out[:, :, :T_out], C_half


def conv1d_subsampler(src_tokens, params):
    """src_tokens: (B, T_in, C_in) -> (T_out, B, C_out), like the PyTorch module."""
    x = jnp.transpose(src_tokens, (0, 2, 1))           # NCW
    c_valid = src_tokens.shape[-1]
    n = len(params)
    for i, (w, b) in enumerate(params):
        out_dtype = jnp.bfloat16 if i < n - 1 else jnp.float32
        x, c_valid = conv1d_glu_layer(x, w, b, c_valid=c_valid, stride=2,
                                      out_dtype=out_dtype)
    x = x[:, :c_valid, :]                               # drop carried channel padding
    # (B, C_out, T_out) -> transpose(1,2).transpose(0,1) == (T_out, B, C_out)
    # TODO(synk): the final layout swap stays as XLA glue; emitting (T,B,C)
    # directly from the kernel would force a <128-lane masked store.
    return jnp.transpose(x, (2, 0, 1))


def init_params(key, in_channels, mid_channels, out_channels, kernel_sizes):
    """Deterministic Conv1d params (PyTorch-style uniform fan-in init)."""
    params = []
    n = len(kernel_sizes)
    for i, k in enumerate(kernel_sizes):
        c_in = in_channels if i == 0 else mid_channels // 2
        c_out = mid_channels if i < n - 1 else out_channels * 2
        key, wk, bk = jax.random.split(key, 3)
        bound = 1.0 / float(np.sqrt(c_in * k))
        w = jax.random.uniform(wk, (c_out, c_in, k), jnp.float32, -bound, bound)
        b = jax.random.uniform(bk, (c_out,), jnp.float32, -bound, bound)
        params.append((w, b))
    return params


def reference_forward(src_tokens, params, compute_dtype=jnp.float32):
    """Pure-JAX reference matching the PyTorch forward (conv in compute_dtype,
    f32 accumulation / GLU).  compute_dtype=bf16 matches the kernel's precision
    (incl. the bias, which the kernel folds into the bf16 weight)."""
    x = jnp.transpose(src_tokens, (0, 2, 1)).astype(jnp.float32)   # (B, C, T)
    for (w, b) in params:
        K = w.shape[-1]
        y = lax.conv_general_dilated(
            x.astype(compute_dtype), w.astype(compute_dtype),
            window_strides=(2,), padding=[(K // 2, K // 2)],
            dimension_numbers=('NCH', 'OIH', 'NCH'),
            preferred_element_type=jnp.float32)
        y = y + b.astype(compute_dtype).astype(jnp.float32)[None, :, None]
        C = y.shape[1]
        x = y[:, :C // 2] * jax.nn.sigmoid(y[:, C // 2:])          # GLU (channel dim)
    return jnp.transpose(x, (2, 0, 1))                             # (T_out, B, C_out)


if __name__ == "__main__":
    key = jax.random.PRNGKey(0)
    B, T_in, C_in = 2, 32, 8
    mid_channels, out_channels = 16, 12
    kernel_sizes = (5, 5, 5, 5)

    key, xk, pk = jax.random.split(key, 3)
    src_tokens = jax.random.normal(xk, (B, T_in, C_in), jnp.float32)
    params = init_params(pk, C_in, mid_channels, out_channels, kernel_sizes)

    y = jax.block_until_ready(conv1d_subsampler(src_tokens, params))

    # Tight check against a precision-matched (bf16 matmul/bias, f32 accumulate)
    # reference, loose check against the pure-f32 PyTorch-equivalent reference.
    y_ref_bf16 = reference_forward(src_tokens, params, compute_dtype=jnp.bfloat16)
    y_ref_f32 = reference_forward(src_tokens, params, compute_dtype=jnp.float32)
    assert y.shape == y_ref_f32.shape, (y.shape, y_ref_f32.shape)
    np.testing.assert_allclose(np.asarray(y), np.asarray(y_ref_bf16),
                               atol=5e-3, rtol=5e-3)
    np.testing.assert_allclose(np.asarray(y), np.asarray(y_ref_f32),
                               atol=5e-2, rtol=5e-2)
    print("KERNEL_OK")
</pallas_src>

<mosaic_0001>
module attributes {stable_mosaic.version = 11 : i64} {
  func.func @kernel(%arg0: i32, %arg1: i32, %arg2: memref<1x32x136xbf16, #tpu.memory_space<vmem>>, %arg3: memref<5x32x16xbf16, #tpu.memory_space<vmem>>, %arg4: memref<1x16x128xbf16, #tpu.memory_space<vmem>>) attributes {dimension_semantics = [#tpu.dimension_semantics<parallel>, #tpu.dimension_semantics<parallel>], iteration_bounds = array<i64: 2, 1>, scalar_prefetch = 0 : i64, scratch_operands = 0 : i64, tpu.core_type = #tpu.core_type<tc>, window_params = [{transform_indices = @transform_0, window_bounds = array<i64: 1, 32, 136>}, {pipeline_mode = #tpu.pipeline_mode<synchronous>, transform_indices = @transform_1, window_bounds = array<i64: 5, 32, 16>}, {transform_indices = @transform_2, window_bounds = array<i64: 1, 16, 128>}]} {
    %c0 = arith.constant 0 : index
    %c0_0 = arith.constant 0 : index
    %c0_1 = arith.constant 0 : index
    %0 = vector.load %arg2[%c0, %c0_0, %c0_1] : memref<1x32x136xbf16, #tpu.memory_space<vmem>>, vector<1x16x128xbf16>
    %1 = vector.shape_cast %0 : vector<1x16x128xbf16> to vector<16x128xbf16>
    %c0_2 = arith.constant 0 : index
    %c0_3 = arith.constant 0 : index
    %c0_4 = arith.constant 0 : index
    %2 = vector.load %arg3[%c0_2, %c0_3, %c0_4] : memref<5x32x16xbf16, #tpu.memory_space<vmem>>, vector<1x32x16xbf16>
    %3 = vector.shape_cast %2 : vector<1x32x16xbf16> to vector<32x16xbf16>
    %cst = arith.constant dense<0.000000e+00> : vector<32x128xf32>
    %4 = tpu.matmul %3, %1, %cst {dimension_numbers = #tpu.dot_dimension_numbers<[1], [0], [0], [1], [0, 0, 1, 1], [], []>} : vector<32x16xbf16>, vector<16x128xbf16>, vector<32x128xf32> -> vector<32x128xf32>
    %c0_5 = arith.constant 0 : index
    %c16 = arith.constant 16 : index
    %c0_6 = arith.constant 0 : index
    %5 = vector.load %arg2[%c0_5, %c16, %c0_6] : memref<1x32x136xbf16, #tpu.memory_space<vmem>>, vector<1x16x128xbf16>
    %6 = vector.shape_cast %5 : vector<1x16x128xbf16> to vector<16x128xbf16>
    %c1 = arith.constant 1 : index
    %c0_7 = arith.constant 0 : index
    %c0_8 = arith.constant 0 : index
    %7 = vector.load %arg3[%c1, %c0_7, %c0_8] : memref<5x32x16xbf16, #tpu.memory_space<vmem>>, vector<1x32x16xbf16>
    %8 = vector.shape_cast %7 : vector<1x32x16xbf16> to vector<32x16xbf16>
    %cst_9 = arith.constant dense<0.000000e+00> : vector<32x128xf32>
    %9 = tpu.matmul %8, %6, %cst_9 {dimension_numbers = #tpu.dot_dimension_numbers<[1], [0], [0], [1], [0, 0, 1, 1], [], []>} : vector<32x16xbf16>, vector<16x128xbf16>, vector<32x128xf32> -> vector<32x128xf32>
    %10 = arith.addf %4, %9 : vector<32x128xf32>
    %c0_10 = arith.constant 0 : index
    %c0_11 = arith.constant 0 : index
    %c1_12 = arith.constant 1 : index
    %11 = vector.load %arg2[%c0_10, %c0_11, %c1_12] : memref<1x32x136xbf16, #tpu.memory_space<vmem>>, vector<1x16x128xbf16>
    %12 = vector.shape_cast %11 : vector<1x16x128xbf16> to vector<16x128xbf16>
    %c2 = arith.constant 2 : index
    %c0_13 = arith.constant 0 : index
    %c0_14 = arith.constant 0 : index
    %13 = vector.load %arg3[%c2, %c0_13, %c0_14] : memref<5x32x16xbf16, #tpu.memory_space<vmem>>, vector<1x32x16xbf16>
    %14 = vector.shape_cast %13 : vector<1x32x16xbf16> to vector<32x16xbf16>
    %cst_15 = arith.constant dense<0.000000e+00> : vector<32x128xf32>
    %15 = tpu.matmul %14, %12, %cst_15 {dimension_numbers = #tpu.dot_dimension_numbers<[1], [0], [0], [1], [0, 0, 1, 1], [], []>} : vector<32x16xbf16>, vector<16x128xbf16>, vector<32x128xf32> -> vector<32x128xf32>
    %16 = arith.addf %10, %15 : vector<32x128xf32>
    %c0_16 = arith.constant 0 : index
    %c16_17 = arith.constant 16 : index
    %c1_18 = arith.constant 1 : index
    %17 = vector.load %arg2[%c0_16, %c16_17, %c1_18] : memref<1x32x136xbf16, #tpu.memory_space<vmem>>, vector<1x16x128xbf16>
    %18 = vector.shape_cast %17 : vector<1x16x128xbf16> to vector<16x128xbf16>
    %c3 = arith.constant 3 : index
    %c0_19 = arith.constant 0 : index
    %c0_20 = arith.constant 0 : index
    %19 = vector.load %arg3[%c3, %c0_19, %c0_20] : memref<5x32x16xbf16, #tpu.memory_space<vmem>>, vector<1x32x16xbf16>
    %20 = vector.shape_cast %19 : vector<1x32x16xbf16> to vector<32x16xbf16>
    %cst_21 = arith.constant dense<0.000000e+00> : vector<32x128xf32>
    %21 = tpu.matmul %20, %18, %cst_21 {dimension_numbers = #tpu.dot_dimension_numbers<[1], [0], [0], [1], [0, 0, 1, 1], [], []>} : vector<32x16xbf16>, vector<16x128xbf16>, vector<32x128xf32> -> vector<32x128xf32>
    %22 = arith.addf %16, %21 : vector<32x128xf32>
    %c0_22 = arith.constant 0 : index
    %c0_23 = arith.constant 0 : index
    %c2_24 = arith.constant 2 : index
    %23 = vector.load %arg2[%c0_22, %c0_23, %c2_24] : memref<1x32x136xbf16, #tpu.memory_space<vmem>>, vector<1x16x128xbf16>
    %24 = vector.shape_cast %23 : vector<1x16x128xbf16> to vector<16x128xbf16>
    %c4 = arith.constant 4 : index
    %c0_25 = arith.constant 0 : index
    %c0_26 = arith.constant 0 : index
    %25 = vector.load %arg3[%c4, %c0_25, %c0_26] : memref<5x32x16xbf16, #tpu.memory_space<vmem>>, vector<1x32x16xbf16>
    %26 = vector.shape_cast %25 : vector<1x32x16xbf16> to vector<32x16xbf16>
    %cst_27 = arith.constant dense<0.000000e+00> : vector<32x128xf32>
    %27 = tpu.matmul %26, %24, %cst_27 {dimension_numbers = #tpu.dot_dimension_numbers<[1], [0], [0], [1], [0, 0, 1, 1], [], []>} : vector<32x16xbf16>, vector<16x128xbf16>, vector<32x128xf32> -> vector<32x128xf32>
    %28 = arith.addf %22, %27 : vector<32x128xf32>
    %29 = vector.extract_strided_slice %28 {offsets = [0, 0], sizes = [16, 128], strides = [1, 1]} : vector<32x128xf32> to vector<16x128xf32>
    %30 = vector.extract_strided_slice %28 {offsets = [16, 0], sizes = [16, 128], strides = [1, 1]} : vector<32x128xf32> to vector<16x128xf32>
    %31 = arith.negf %30 : vector<16x128xf32>
    %32 = math.exp %31 : vector<16x128xf32>
    %cst_28 = arith.constant 1.000000e+00 : f32
    %33 = vector.broadcast %cst_28 : f32 to vector<16x128xf32>
    %34 = arith.addf %33, %32 : vector<16x128xf32>
    %35 = arith.divf %33, %34 : vector<16x128xf32>
    %36 = arith.mulf %29, %35 : vector<16x128xf32>
    %37 = arith.truncf %36 : vector<16x128xf32> to vector<16x128xbf16>
    %c0_29 = arith.constant 0 : index
    %c0_30 = arith.constant 0 : index
    %c0_31 = arith.constant 0 : index
    %38 = vector.load %arg4[%c0_29, %c0_30, %c0_31] : memref<1x16x128xbf16, #tpu.memory_space<vmem>>, vector<1x16x128xbf16>
    %39 = vector.shape_cast %38 : vector<1x16x128xbf16> to vector<16x128xbf16>
    %40 = vector.shape_cast %37 : vector<16x128xbf16> to vector<1x16x128xbf16>
    tpu.vector_store %arg4[%c0_29, %c0_30, %c0_31], %40 {strides = array<i32>} : memref<1x16x128xbf16, #tpu.memory_space<vmem>>, vector<1x16x128xbf16>,
    return
  }
  func.func @transform_0(%arg0: i32, %arg1: i32) -> (i32, i32, i32) {
    %c1_i32 = arith.constant 1 : i32
    %0 = arith.muli %arg0, %c1_i32 : i32
    %1 = arith.addi %0, %arg1 : i32
    %c0_i32 = arith.constant 0 : i32
    %c0_i32_0 = arith.constant 0 : i32
    %c0_i32_1 = arith.constant 0 : i32
    return %1, %c0_i32, %c0_i32_0 : i32, i32, i32
  }
  func.func @transform_1(%arg0: i32, %arg1: i32) -> (i32, i32, i32) {
    %c0_i32 = arith.constant 0 : i32
    %c0_i32_0 = arith.constant 0 : i32
    %c0_i32_1 = arith.constant 0 : i32
    %c0_i32_2 = arith.constant 0 : i32
    return %c0_i32, %c0_i32_0, %c0_i32_1 : i32, i32, i32
  }
  func.func @transform_2(%arg0: i32, %arg1: i32) -> (i32, i32, i32) {
    %c0_i32 = arith.constant 0 : i32
    %c0_i32_0 = arith.constant 0 : i32
    return %arg0, %c0_i32, %arg1 : i32, i32, i32
  }
}

module attributes {stable_mosaic.version = 11 : i64} {
  func.func @kernel(%arg0: i32, %arg1: i32, %arg2: memref<1x32x136xbf16, #tpu.memory_space<vmem>>, %arg3: memref<5x32x16xbf16, #tpu.memory_space<vmem>>, %arg4: memref<1x16x128xbf16, #tpu.memory_space<vmem>>) attributes {dimension_semantics = [#tpu.dimension_semantics<parallel>, #tpu.dimension_semantics<parallel>], iteration_bounds = array<i64: 2, 1>, scalar_prefetch = 0 : i64, scratch_operands = 0 : i64, tpu.core_type = #tpu.core_type<tc>, window_params = [{transform_indices = @transform_0, window_bounds = array<i64: 1, 32, 136>}, {pipeline_mode = #tpu.pipeline_mode<synchronous>, transform_indices = @transform_1, window_bounds = array<i64: 5, 32, 16>}, {transform_indices = @transform_2, window_bounds = array<i64: 1, 16, 128>}]} {
    %c0 = arith.constant 0 : index
    %c0_0 = arith.constant 0 : index
    %c0_1 = arith.constant 0 : index
    %0 = vector.load %arg2[%c0, %c0_0, %c0_1] : memref<1x32x136xbf16, #tpu.memory_space<vmem>>, vector<1x16x128xbf16>
    %1 = vector.shape_cast %0 : vector<1x16x128xbf16> to vector<16x128xbf16>
    %c0_2 = arith.constant 0 : index
    %c0_3 = arith.constant 0 : index
    %c0_4 = arith.constant 0 : index
    %2 = vector.load %arg3[%c0_2, %c0_3, %c0_4] : memref<5x32x16xbf16, #tpu.memory_space<vmem>>, vector<1x32x16xbf16>
    %3 = vector.shape_cast %2 : vector<1x32x16xbf16> to vector<32x16xbf16>
    %cst = arith.constant dense<0.000000e+00> : vector<32x128xf32>
    %4 = tpu.matmul %3, %1, %cst {dimension_numbers = #tpu.dot_dimension_numbers<[1], [0], [0], [1], [0, 0, 1, 1], [], []>} : vector<32x16xbf16>, vector<16x128xbf16>, vector<32x128xf32> -> vector<32x128xf32>
    %c0_5 = arith.constant 0 : index
    %c16 = arith.constant 16 : index
    %c0_6 = arith.constant 0 : index
    %5 = vector.load %arg2[%c0_5, %c16, %c0_6] : memref<1x32x136xbf16, #tpu.memory_space<vmem>>, vector<1x16x128xbf16>
    %6 = vector.shape_cast %5 : vector<1x16x128xbf16> to vector<16x128xbf16>
    %c1 = arith.constant 1 : index
    %c0_7 = arith.constant 0 : index
    %c0_8 = arith.constant 0 : index
    %7 = vector.load %arg3[%c1, %c0_7, %c0_8] : memref<5x32x16xbf16, #tpu.memory_space<vmem>>, vector<1x32x16xbf16>
    %8 = vector.shape_cast %7 : vector<1x32x16xbf16> to vector<32x16xbf16>
    %cst_9 = arith.constant dense<0.000000e+00> : vector<32x128xf32>
    %9 = tpu.matmul %8, %6, %cst_9 {dimension_numbers = #tpu.dot_dimension_numbers<[1], [0], [0], [1], [0, 0, 1, 1], [], []>} : vector<32x16xbf16>, vector<16x128xbf16>, vector<32x128xf32> -> vector<32x128xf32>
    %10 = arith.addf %4, %9 : vector<32x128xf32>
    %c0_10 = arith.constant 0 : index
    %c0_11 = arith.constant 0 : index
    %c1_12 = arith.constant 1 : index
    %11 = vector.load %arg2[%c0_10, %c0_11, %c1_12] : memref<1x32x136xbf16, #tpu.memory_space<vmem>>, vector<1x16x128xbf16>
    %12 = vector.shape_cast %11 : vector<1x16x128xbf16> to vector<16x128xbf16>
    %c2 = arith.constant 2 : index
    %c0_13 = arith.constant 0 : index
    %c0_14 = arith.constant 0 : index
    %13 = vector.load %arg3[%c2, %c0_13, %c0_14] : memref<5x32x16xbf16, #tpu.memory_space<vmem>>, vector<1x32x16xbf16>
    %14 = vector.shape_cast %13 : vector<1x32x16xbf16> to vector<32x16xbf16>
    %cst_15 = arith.constant dense<0.000000e+00> : vector<32x128xf32>
    %15 = tpu.matmul %14, %12, %cst_15 {dimension_numbers = #tpu.dot_dimension_numbers<[1], [0], [0], [1], [0, 0, 1, 1], [], []>} : vector<32x16xbf16>, vector<16x128xbf16>, vector<32x128xf32> -> vector<32x128xf32>
    %16 = arith.addf %10, %15 : vector<32x128xf32>
    %c0_16 = arith.constant 0 : index
    %c16_17 = arith.constant 16 : index
    %c1_18 = arith.constant 1 : index
    %17 = vector.load %arg2[%c0_16, %c16_17, %c1_18] : memref<1x32x136xbf16, #tpu.memory_space<vmem>>, vector<1x16x128xbf16>
    %18 = vector.shape_cast %17 : vector<1x16x128xbf16> to vector<16x128xbf16>
    %c3 = arith.constant 3 : index
    %c0_19 = arith.constant 0 : index
    %c0_20 = arith.constant 0 : index
    %19 = vector.load %arg3[%c3, %c0_19, %c0_20] : memref<5x32x16xbf16, #tpu.memory_space<vmem>>, vector<1x32x16xbf16>
    %20 = vector.shape_cast %19 : vector<1x32x16xbf16> to vector<32x16xbf16>
    %cst_21 = arith.constant dense<0.000000e+00> : vector<32x128xf32>
    %21 = tpu.matmul %20, %18, %cst_21 {dimension_numbers = #tpu.dot_dimension_numbers<[1], [0], [0], [1], [0, 0, 1, 1], [], []>} : vector<32x16xbf16>, vector<16x128xbf16>, vector<32x128xf32> -> vector<32x128xf32>
    %22 = arith.addf %16, %21 : vector<32x128xf32>
    %c0_22 = arith.constant 0 : index
    %c0_23 = arith.constant 0 : index
    %c2_24 = arith.constant 2 : index
    %23 = vector.load %arg2[%c0_22, %c0_23, %c2_24] : memref<1x32x136xbf16, #tpu.memory_space<vmem>>, vector<1x16x128xbf16>
    %24 = vector.shape_cast %23 : vector<1x16x128xbf16> to vector<16x128xbf16>
    %c4 = arith.constant 4 : index
    %c0_25 = arith.constant 0 : index
    %c0_26 = arith.constant 0 : index
    %25 = vector.load %arg3[%c4, %c0_25, %c0_26] : memref<5x32x16xbf16, #tpu.memory_space<vmem>>, vector<1x32x16xbf16>
    %26 = vector.shape_cast %25 : vector<1x32x16xbf16> to vector<32x16xbf16>
    %cst_27 = arith.constant dense<0.000000e+00> : vector<32x128xf32>
    %27 = tpu.matmul %26, %24, %cst_27 {dimension_numbers = #tpu.dot_dimension_numbers<[1], [0], [0], [1], [0, 0, 1, 1], [], []>} : vector<32x16xbf16>, vector<16x128xbf16>, vector<32x128xf32> -> vector<32x128xf32>
    %28 = arith.addf %22, %27 : vector<32x128xf32>
    %29 = vector.extract_strided_slice %28 {offsets = [0, 0], sizes = [16, 128], strides = [1, 1]} : vector<32x128xf32> to vector<16x128xf32>
    %30 = vector.extract_strided_slice %28 {offsets = [16, 0], sizes = [16, 128], strides = [1, 1]} : vector<32x128xf32> to vector<16x128xf32>
    %31 = arith.negf %30 : vector<16x128xf32>
    %32 = math.exp %31 : vector<16x128xf32>
    %cst_28 = arith.constant 1.000000e+00 : f32
    %33 = vector.broadcast %cst_28 : f32 to vector<16x128xf32>
    %34 = arith.addf %33, %32 : vector<16x128xf32>
    %35 = arith.divf %33, %34 : vector<16x128xf32>
    %36 = arith.mulf %29, %35 : vector<16x128xf32>
    %37 = arith.truncf %36 : vector<16x128xf32> to vector<16x128xbf16>
    %c0_29 = arith.constant 0 : index
    %c0_30 = arith.constant 0 : index
    %c0_31 = arith.constant 0 : index
    %38 = vector.load %arg4[%c0_29, %c0_30, %c0_31] : memref<1x16x128xbf16, #tpu.memory_space<vmem>>, vector<1x16x128xbf16>
    %39 = vector.shape_cast %38 : vector<1x16x128xbf16> to vector<16x128xbf16>
    %40 = vector.shape_cast %37 : vector<16x128xbf16> to vector<1x16x128xbf16>
    tpu.vector_store %arg4[%c0_29, %c0_30, %c0_31], %40 {strides = array<i32>} : memref<1x16x128xbf16, #tpu.memory_space<vmem>>, vector<1x16x128xbf16>,
    return
  }
  func.func @transform_0(%arg0: i32, %arg1: i32) -> (i32, i32, i32) {
    %c1_i32 = arith.constant 1 : i32
    %0 = arith.muli %arg0, %c1_i32 : i32
    %1 = arith.addi %0, %arg1 : i32
    %c0_i32 = arith.constant 0 : i32
    %c0_i32_0 = arith.constant 0 : i32
    %c0_i32_1 = arith.constant 0 : i32
    return %1, %c0_i32, %c0_i32_0 : i32, i32, i32
  }
  func.func @transform_1(%arg0: i32, %arg1: i32) -> (i32, i32, i32) {
    %c0_i32 = arith.constant 0 : i32
    %c0_i32_0 = arith.constant 0 : i32
    %c0_i32_1 = arith.constant 0 : i32
    %c0_i32_2 = arith.constant 0 : i32
    return %c0_i32, %c0_i32_0, %c0_i32_1 : i32, i32, i32
  }
  func.func @transform_2(%arg0: i32, %arg1: i32) -> (i32, i32, i32) {
    %c0_i32 = arith.constant 0 : i32
    %c0_i32_0 = arith.constant 0 : i32
    return %arg0, %c0_i32, %arg1 : i32, i32, i32
  }
}

</mosaic_0001>

<llo_original>
// kernel: tpu_custom_call.1
$region0: #{tpu_custom_call.1}
  #allocation0 [shape = 'u32[]', space=smem, size = 0x4, offset = 0x4, fixed_abs, tag = 'smem constant byte address 0x4 - core index']
  #allocation1 [shape = 'u32[144,128]{1,0:T(1,128)}', space=vmem, size = 0x12000, scoped, tag = 'internal scratch']
  %s0 = inlined_call_operand.vmem [shape: bf16[2,32,136], index: 0, kind: input, shape index: {}]
  %s1 = inlined_call_operand.vmem [shape: bf16[5,32,16], index: 1, kind: input, shape index: {}]
  %s2 = inlined_call_operand.hbm [shape: bf16[2,16,128], index: 2, kind: output, shape index: {}]
  %s3 = sld [smem:[#allocation0]]
  $region41: #{tpu_custom_call.1} parent=0
    _
  %s5 = ssub.s32 1, %s3
  %s6 = scalar_select 0, %s5, %s3
  $region1: #{tpu_custom_call.1} parent=0
    #allocation2 [shape = 'u8[8192]{0}', space=vmem, size = 0x2000, scoped, tag = 'output window, operand 0']
    #allocation3 [shape = 's32[2]{0}', space=sflag, size = 0x8, scoped, tag = 'scoped memory for tpu_custom_call.1']
    %7 = vsyncpa [#allocation3], 0
    %s8 = scalar_lea.sflag [#allocation3], 1
    %9 = vsyncpa %s8, 0
    loop: start=0, step=1, limit=4
    $region2: #{tpu_custom_call.1} parent=1 // loop_pre_header
      _
    $region3: #{tpu_custom_call.1} parent=1 // loop_header
      %s11 = sphi 0, %s15
      %p12 = scmp.ge.s32.totalorder %s11, 4
      %s18 = sphi 0, %s30
      %s19 = sphi 0, %s26
      %s20 = sphi 0, %s18
      %s21 = sphi 0, %s19
      %s22 = sphi 0, %s20
      %s23 = sphi 0, %s21
      %s35 = sphi 0, %s37
      %s38 = sphi 0, %s35
      %s39 = sphi 0, %s38
      %s55 = sphi 0, %s39
      %s59 = sphi 0, %s59
      %s61 = sphi 0, %s59
      %s62 = sphi 0, %s61
      %s76 = sphi 0, %s62
      %s84 = sphi 0, %s86
      %s87 = sphi 0, %s84
      %s88 = sphi 0, %s87
      %s104 = sphi 0, %s88
    $region4: #{tpu_custom_call.1} parent=1 // loop_header_branch
      %14 = sbr.rel (%p12) target = $region8
    $region5: #{tpu_custom_call.1} parent=1 // loop_body
      %s16 = ssub.s32 %s11, 1
      %s17 = ssub.s32 %s11, 2
      %s24 = sadd.s32 1, %s19
      %p25 = scmp.ge.s32.totalorder %s24, 1
      %s26 = scalar_select %p25, 0, %s24
      %s27 = sadd.s32 1, %s18
      %s28 = scalar_select %p25, %s27, %s18
      %p29 = scmp.ge.s32.totalorder %s28, 2
      %s30 = scalar_select %p29, 0, %s28
      %s31 = sadd.s32 %s18, %s19
      %s32 = sadd.s32 %s30, %s26
      %s33 = ssub.s32 %s31, %s32
      %p34 = scmp.eq.s32.totalorder %s33, 0
      %s36 = sadd.s32 %s35, 1
      %s37 = scalar_select %p34, %s35, %s36
      %p40 = pneg %p34
      %p41 = scmp.eq.s32.totalorder %s11, 1
      %p42 = por %p40, %p41
      %p43 = scmp.ne.s32.totalorder %s35, %s38
      %p44 = scmp.eq.s32.totalorder %s11, 0
      %p45 = por %p43, %p44
      %p46 = scmp.ne.s32.totalorder %s35, %s38
      %p47 = scmp.eq.s32.totalorder %s16, 1
      %p48 = por %p46, %p47
      %p49 = scmp.ne.s32.totalorder %s38, %s39
      %p50 = scmp.eq.s32.totalorder %s16, 0
      %p51 = por %p49, %p50
      %p52 = scmp.ne.s32.totalorder %s38, %s39
      %p53 = scmp.eq.s32.totalorder %s17, 1
      %p54 = por %p52, %p53
      %p56 = scmp.ne.s32.totalorder %s39, %s55
      %p57 = scmp.eq.s32.totalorder %s17, 0
      %p58 = por %p56, %p57
      %s60 = sadd.s32 %s59, 1
      %p63 = scmp.eq.s32.totalorder %s11, 1
      %p64 = scmp.ne.s32.totalorder %s59, %s61
      %p65 = scmp.eq.s32.totalorder %s11, 0
      %p66 = por %p64, %p65
      %p67 = scmp.ne.s32.totalorder %s59, %s61
      %p68 = scmp.eq.s32.totalorder %s16, 1
      %p69 = por %p67, %p68
      %p70 = scmp.ne.s32.totalorder %s61, %s62
      %p71 = scmp.eq.s32.totalorder %s16, 0
      %p72 = por %p70, %p71
      %p73 = scmp.ne.s32.totalorder %s61, %s62
      %p74 = scmp.eq.s32.totalorder %s17, 1
      %p75 = por %p73, %p74
      %p77 = scmp.ne.s32.totalorder %s62, %s76
      %p78 = scmp.eq.s32.totalorder %s17, 0
      %p79 = por %p77, %p78
      %s80 = ssub.s32 %s18, %s30
      %s81 = ssub.s32 %s19, %s26
      %s82 = sor.u32 %s80, %s81
      %p83 = scmp.eq.s32.totalorder %s82, 0
      %s85 = sadd.s32 %s84, 1
      %s86 = scalar_select %p83, %s84, %s85
      %p89 = pneg %p83
      %p90 = scmp.eq.s32.totalorder %s11, 1
      %p91 = por %p89, %p90
      %p92 = scmp.ne.s32.totalorder %s84, %s87
      %p93 = scmp.eq.s32.totalorder %s11, 0
      %p94 = por %p92, %p93
      %p95 = scmp.ne.s32.totalorder %s84, %s87
      %p96 = scmp.eq.s32.totalorder %s16, 1
      %p97 = por %p95, %p96
      %p98 = scmp.ne.s32.totalorder %s87, %s88
      %p99 = scmp.eq.s32.totalorder %s16, 0
      %p100 = por %p98, %p99
      %p101 = scmp.ne.s32.totalorder %s87, %s88
      %p102 = scmp.eq.s32.totalorder %s17, 1
      %p103 = por %p101, %p102
      %p105 = scmp.ne.s32.totalorder %s88, %s104
      %p106 = scmp.eq.s32.totalorder %s17, 0
      %p107 = por %p105, %p106
      %p108 = scmp.le.s32.totalorder 1, %s11
      %p109 = scmp.lt.s32.totalorder %s11, 3
      %p110 = pnand %p108, %p109
      %p111 = pneg %p110
      // Predicated region
      $region9: #{tpu_custom_call.1} parent=5 // pred_check
        _
      $region10: #{tpu_custom_call.1} parent=5 // pred_check_branch
        %113 = sbr.rel (%p110) target = $region12
      $region11: #{tpu_custom_call.1} parent=5 // pred_region
        %s114 = ssub.s32 %s11, 1
        // Predicated region
        $region13: #{tpu_custom_call.1} parent=11 // pred_check
          %p115 = pneg %p72
        $region14: #{tpu_custom_call.1} parent=11 // pred_check_branch
          %117 = sbr.rel (%p115) target = $region16
        $region15: #{tpu_custom_call.1} parent=11 // pred_region
          _
        $region16: #{tpu_custom_call.1} parent=11 // pred_fallthru
          _
      $region12: #{tpu_custom_call.1} parent=5 // pred_fallthru
        _
      %p118 = scmp.lt.s32.totalorder %s11, 2
      // Predicated region
      $region17: #{tpu_custom_call.1} parent=5 // pred_check
        %p119 = pneg %p118
      $region18: #{tpu_custom_call.1} parent=5 // pred_check_branch
        %121 = sbr.rel (%p119) target = $region20
      $region19: #{tpu_custom_call.1} parent=5 // pred_region
        // Predicated region
        $region21: #{tpu_custom_call.1} parent=19 // pred_check
          %p122 = pneg %p45
        $region22: #{tpu_custom_call.1} parent=19 // pred_check_branch
          %124 = sbr.rel (%p122) target = $region24
        $region23: #{tpu_custom_call.1} parent=19 // pred_region
          %s125 = sadd.s32 %s18, %s19
          %p126 = scmp.lt.s32.totalorder %s125, 1
          %s127 = scalar_select %p126, %s125, 1
          %s128 = smul.addr %s127, 8
          %s129 = smul.addr %s128, 4
          %s130 = scalar_lea.vmem %s0, %s129
          %s131 = sadd.s32 %s18, %s19
        $region24: #{tpu_custom_call.1} parent=19 // pred_fallthru
          _
      $region20: #{tpu_custom_call.1} parent=5 // pred_fallthru
        _
      %p132 = scmp.le.s32.totalorder 1, %s11
      %p133 = scmp.lt.s32.totalorder %s11, 3
      %p134 = pnand %p132, %p133
      %p135 = pneg %p134
      // Predicated region
      $region25: #{tpu_custom_call.1} parent=5 // pred_check
        _
      $region26: #{tpu_custom_call.1} parent=5 // pred_check_branch
        %137 = sbr.rel (%p134) target = $region28
      $region27: #{tpu_custom_call.1} parent=5 // pred_region
        %s138 = ssub.s32 %s11, 1
        %s139 = sadd.s32 %s20, %s21
        %p140 = scmp.lt.s32.totalorder %s139, 1
        %s141 = scalar_select %p140, %s139, 1
        %s142 = smul.addr %s141, 8
        %s143 = smul.addr %s142, 4
        %s144 = scalar_lea.vmem %s0, %s143
        %p145 = pneg %p51
        %p146 = pneg %p48
        %p147 = pneg %p72
        %p148 = pneg %p69
        %p149 = pneg %p100
        %p150 = pneg %p97
        %s151 = sand.u32 %s87, 1
        %s152 = scalar_lea.sflag [#allocation3], %s151
        %s153 = sand.u32 %s87, 1
        %s154 = smul.addr %s153, 8
        %s155 = scalar_lea.vmem [#allocation2], %s154
        %s156 = sadd.s32 %s20, %s21
        %p157 = scmp.lt.s32.totalorder %s156, 1
        %s158 = scalar_select %p157, %s156, 1
        %s159 = smul.addr %s158, 8
        %s160 = smul.addr %s159, 4
        %s161 = scalar_lea.vmem %s0, %s160
        %s162 = sadd.s32 %s20, %s21
        %v164 = vld [vmem:[%s161] sm:$0xf]
        %v165 = vld [vmem:[%s161 + $0x8] sm:$0xf]
        %v166 = vld [vmem:[%s1] sm:$0xf]
        %v167 = vld [vmem:[%s1 + $0x4] sm:$0xf]
        %v168 = vld [vmem:[%s1 + $0x8] sm:$0xf]
        %v169 = vld [vmem:[%s1 + $0xc] sm:$0xf]
        %v170 = vld [vmem:[%s161 + $0x10] sm:$0xf]
        %v171 = vld [vmem:[%s161 + $0x18] sm:$0xf]
        %s172 = scalar_lea.vmem %s1, 16
        %v173 = vld [vmem:[%s172] sm:$0xf]
        %v174 = vld [vmem:[%s172 + $0x4] sm:$0xf]
        %v175 = vld [vmem:[%s172 + $0x8] sm:$0xf]
        %v176 = vld [vmem:[%s172 + $0xc] sm:$0xf]
        %v181 = vunpack.c.l.b16 %v173
        %v182 = vunpack.c.l.b16 %v174
        %v183 = vunpack.c.l.b16 %v175
        %v184 = vunpack.c.l.b16 %v176
        %v185 = vpack.c.b16 %v182, %v181
        %v186 = vpack.c.b16 %v184, %v183
        %v189 = vunpack.c.l.b16 %v170
        %v190 = vunpack.c.l.b16 %v171
        %v191 = vpack.c.b16 %v190, %v189
        %vm193 = vcmask 130048
        %v195 = vsel %vm193, %v185, 0
        %v198 = vsel %vm193, %v186, 0
        %200 = vmatprep.subr.bf16.mxu0 0
        %201 = vmatpush1.bf16.msra.mxu0 0
        %202 = vmatprep.subr.bf16.mxu0 0
        %203 = vmatpush1.bf16.msra.mxu0 0
        %204 = vmatprep.subr.bf16.mxu0 0
        %205 = vmatpush1.bf16.msra.mxu0 0
        %206 = vmatprep.subr.bf16.mxu0 0
        %207 = vmatpush1.bf16.msra.mxu0 0
        %208 = vmatprep.subr.bf16.mxu0 0
        %209 = vmatpush1.bf16.msra.mxu0 0
        %210 = vmatprep.subr.bf16.mxu0 0
        %211 = vmatpush1.bf16.msra.mxu0 0
        %212 = vmatprep.subr.bf16.mxu0 0
        %213 = vmatpush1.bf16.msra.mxu0 0
        %214 = vmatprep.subr.bf16.mxu0 0
        %215 = vmatpush1.bf16.msra.mxu0 %v191
        %216 = vmatprep.subr.bf16.mxu0 0
        %217 = vmatpush2.bf16.msra.mxu0 0
        %218 = vmatprep.subr.bf16.mxu0 0
        %219 = vmatpush2.bf16.msra.mxu0 0
        %220 = vmatprep.subr.bf16.mxu0 0
        %221 = vmatpush2.bf16.msra.mxu0 0
        %222 = vmatprep.subr.bf16.mxu0 0
        %223 = vmatpush2.bf16.msra.mxu0 0
        %224 = vmatprep.subr.bf16.mxu0 0
        %225 = vmatpush2.bf16.msra.mxu0 0
        %226 = vmatprep.subr.bf16.mxu0 0
        %227 = vmatpush2.bf16.msra.mxu0 0
        %228 = vmatprep.subr.bf16.mxu0 0
        %229 = vmatpush2.bf16.msra.mxu0 0
        %230 = vmatprep.subr.bf16.mxu0 0
        %231 = vmatpush2.bf16.msra.mxu0 0
        %232 = vmatprep.mubr.bf16.mxu0 0
        %233 = vmatmul.mubr.bf16.gmra.mxu0 %v195
        %v234 = vpop.f32.mrf.mxu0
        %v235 = vadd.f32 0.0, %v234
        %v236 = vpop.f32.mrf.mxu0
        %v237 = vpop.f32.mrf.mxu0
        %v238 = vadd.f32 0.0, %v237
        %v239 = vpop.f32.mrf.mxu0
        %240 = vmatprep.mubr.bf16.mxu0 0
        %241 = vmatmul.mubr.bf16.gmra.mxu0 %v198
        %v242 = vpop.f32.mrf.mxu0
        %v243 = vadd.f32 0.0, %v242
        %v244 = vpop.f32.mrf.mxu0
        %v245 = vpop.f32.mrf.mxu0
        %v246 = vadd.f32 0.0, %v245
        %v247 = vpop.f32.mrf.mxu0
        %248 = vdwg.mxu0
        %v253 = vunpack.c.l.b16 %v166
        %v254 = vunpack.c.l.b16 %v167
        %v255 = vunpack.c.l.b16 %v168
        %v256 = vunpack.c.l.b16 %v169
        %v257 = vpack.c.b16 %v254, %v253
        %v258 = vpack.c.b16 %v256, %v255
        %v261 = vunpack.c.l.b16 %v164
        %v262 = vunpack.c.l.b16 %v165
        %v263 = vpack.c.b16 %v262, %v261
        %v266 = vsel %vm193, %v257, 0
        %v269 = vsel %vm193, %v258, 0
        %271 = vmatprep.subr.bf16.mxu0 0
        %272 = vmatpush1.bf16.msra.mxu0 0
        %273 = vmatprep.subr.bf16.mxu0 0
        %274 = vmatpush1.bf16.msra.mxu0 0
        %275 = vmatprep.subr.bf16.mxu0 0
        %276 = vmatpush1.bf16.msra.mxu0 0
        %277 = vmatprep.subr.bf16.mxu0 0
        %278 = vmatpush1.bf16.msra.mxu0 0
        %279 = vmatprep.subr.bf16.mxu0 0
        %280 = vmatpush1.bf16.msra.mxu0 0
        %281 = vmatprep.subr.bf16.mxu0 0
        %282 = vmatpush1.bf16.msra.mxu0 0
        %283 = vmatprep.subr.bf16.mxu0 0
        %284 = vmatpush1.bf16.msra.mxu0 0
        %285 = vmatprep.subr.bf16.mxu0 0
        %286 = vmatpush1.bf16.msra.mxu0 %v263
        %287 = vmatprep.subr.bf16.mxu0 0
        %288 = vmatpush2.bf16.msra.mxu0 0
        %289 = vmatprep.subr.bf16.mxu0 0
        %290 = vmatpush2.bf16.msra.mxu0 0
        %291 = vmatprep.subr.bf16.mxu0 0
        %292 = vmatpush2.bf16.msra.mxu0 0
        %293 = vmatprep.subr.bf16.mxu0 0
        %294 = vmatpush2.bf16.msra.mxu0 0
        %295 = vmatprep.subr.bf16.mxu0 0
        %296 = vmatpush2.bf16.msra.mxu0 0
        %297 = vmatprep.subr.bf16.mxu0 0
        %298 = vmatpush2.bf16.msra.mxu0 0
        %299 = vmatprep.subr.bf16.mxu0 0
        %300 = vmatpush2.bf16.msra.mxu0 0
        %301 = vmatprep.subr.bf16.mxu0 0
        %302 = vmatpush2.bf16.msra.mxu0 0
        %303 = vmatprep.mubr.bf16.mxu0 0
        %304 = vmatmul.mubr.bf16.gmra.mxu0 %v266
        %v305 = vpop.f32.mrf.mxu0
        %v306 = vadd.f32 %v235, %v305
        %v307 = vpop.f32.mrf.mxu0
        %v308 = vpop.f32.mrf.mxu0
        %v309 = vadd.f32 %v238, %v308
        %v310 = vpop.f32.mrf.mxu0
        %311 = vmatprep.mubr.bf16.mxu0 0
        %312 = vmatmul.mubr.bf16.gmra.mxu0 %v269
        %v313 = vpop.f32.mrf.mxu0
        %v314 = vadd.f32 %v243, %v313
        %v315 = vpop.f32.mrf.mxu0
        %v316 = vpop.f32.mrf.mxu0
        %v317 = vadd.f32 %v246, %v316
        %v318 = vpop.f32.mrf.mxu0
        %319 = vdwg.mxu0
        %v320 = vld [vmem:[%s161] sm:$0xff]
        %v321 = vld [vmem:[%s161 + $0x8] sm:$0xff]
        %s322 = scalar_lea.vmem %s1, 32
        %v323 = vld [vmem:[%s322] sm:$0xf]
        %v324 = vld [vmem:[%s322 + $0x4] sm:$0xf]
        %v325 = vld [vmem:[%s322 + $0x8] sm:$0xf]
        %v326 = vld [vmem:[%s322 + $0xc] sm:$0xf]
        %v331 = vunpack.c.l.b16 %v323
        %v332 = vunpack.c.l.b16 %v324
        %v333 = vunpack.c.l.b16 %v325
        %v334 = vunpack.c.l.b16 %v326
        %v335 = vpack.c.b16 %v332, %v331
        %v336 = vpack.c.b16 %v334, %v333
        %v339 = vunpack.c.l.b16 %v320
        %v340 = vunpack.c.h.b16 %v320
        %v341 = vunpack.c.l.b16 %v321
        %v342 = vunpack.c.h.b16 %v321
        %v343 = vpack.c.b16 %v341, %v339
        %v344 = vpack.c.b16 %v342, %v340
        %345 = vrot.lane.b32.xlu0 %v343, 127
        %v346 = vpop.permute.xlu0 %345
        %347 = vrot.lane.b32.xlu0 %v344, 127
        %v348 = vpop.permute.xlu0 %347
        %vm349 = vcmask 1039360
        %v350 = vsel %vm349, %v346, %v348
        %v353 = vsel %vm193, %v335, 0
        %v356 = vsel %vm193, %v336, 0
        %358 = vmatprep.subr.bf16.mxu0 0
        %359 = vmatpush1.bf16.msra.mxu0 0
        %360 = vmatprep.subr.bf16.mxu0 0
        %361 = vmatpush1.bf16.msra.mxu0 0
        %362 = vmatprep.subr.bf16.mxu0 0
        %363 = vmatpush1.bf16.msra.mxu0 0
        %364 = vmatprep.subr.bf16.mxu0 0
        %365 = vmatpush1.bf16.msra.mxu0 0
        %366 = vmatprep.subr.bf16.mxu0 0
        %367 = vmatpush1.bf16.msra.mxu0 0
        %368 = vmatprep.subr.bf16.mxu0 0
        %369 = vmatpush1.bf16.msra.mxu0 0
        %370 = vmatprep.subr.bf16.mxu0 0
        %371 = vmatpush1.bf16.msra.mxu0 0
        %372 = vmatprep.subr.bf16.mxu0 0
        %373 = vmatpush1.bf16.msra.mxu0 %v350
        %374 = vmatprep.subr.bf16.mxu0 0
        %375 = vmatpush2.bf16.msra.mxu0 0
        %376 = vmatprep.subr.bf16.mxu0 0
        %377 = vmatpush2.bf16.msra.mxu0 0
        %378 = vmatprep.subr.bf16.mxu0 0
        %379 = vmatpush2.bf16.msra.mxu0 0
        %380 = vmatprep.subr.bf16.mxu0 0
        %381 = vmatpush2.bf16.msra.mxu0 0
        %382 = vmatprep.subr.bf16.mxu0 0
        %383 = vmatpush2.bf16.msra.mxu0 0
        %384 = vmatprep.subr.bf16.mxu0 0
        %385 = vmatpush2.bf16.msra.mxu0 0
        %386 = vmatprep.subr.bf16.mxu0 0
        %387 = vmatpush2.bf16.msra.mxu0 0
        %388 = vmatprep.subr.bf16.mxu0 0
        %389 = vmatpush2.bf16.msra.mxu0 0
        %390 = vmatprep.mubr.bf16.mxu0 0
        %391 = vmatmul.mubr.bf16.gmra.mxu0 %v353
        %v392 = vpop.f32.mrf.mxu0
        %v393 = vadd.f32 0.0, %v392
        %v394 = vpop.f32.mrf.mxu0
        %v395 = vpop.f32.mrf.mxu0
        %v396 = vadd.f32 0.0, %v395
        %v397 = vpop.f32.mrf.mxu0
        %398 = vmatprep.mubr.bf16.mxu0 0
        %399 = vmatmul.mubr.bf16.gmra.mxu0 %v356
        %v400 = vpop.f32.mrf.mxu0
        %v401 = vadd.f32 0.0, %v400
        %v402 = vpop.f32.mrf.mxu0
        %v403 = vpop.f32.mrf.mxu0
        %v404 = vadd.f32 0.0, %v403
        %v405 = vpop.f32.mrf.mxu0
        %406 = vdwg.mxu0
        %v407 = vadd.f32 %v306, %v393
        %v408 = vadd.f32 %v309, %v396
        %v409 = vadd.f32 %v314, %v401
        %v410 = vadd.f32 %v317, %v404
        %v411 = vld [vmem:[%s161 + $0x10] sm:$0xff]
        %v412 = vld [vmem:[%s161 + $0x18] sm:$0xff]
        %s413 = scalar_lea.vmem %s1, 48
        %v414 = vld [vmem:[%s413] sm:$0xf]
        %v415 = vld [vmem:[%s413 + $0x4] sm:$0xf]
        %v416 = vld [vmem:[%s413 + $0x8] sm:$0xf]
        %v417 = vld [vmem:[%s413 + $0xc] sm:$0xf]
        %v422 = vunpack.c.l.b16 %v414
        %v423 = vunpack.c.l.b16 %v415
        %v424 = vunpack.c.l.b16 %v416
        %v425 = vunpack.c.l.b16 %v417
        %v426 = vpack.c.b16 %v423, %v422
        %v427 = vpack.c.b16 %v425, %v424
        %v430 = vunpack.c.l.b16 %v411
        %v431 = vunpack.c.h.b16 %v411
        %v432 = vunpack.c.l.b16 %v412
        %v433 = vunpack.c.h.b16 %v412
        %v434 = vpack.c.b16 %v432, %v430
        %v435 = vpack.c.b16 %v433, %v431
        %436 = vrot.lane.b32.xlu0 %v434, 127
        %v437 = vpop.permute.xlu0 %436
        %438 = vrot.lane.b32.xlu0 %v435, 127
        %v439 = vpop.permute.xlu0 %438
        %v440 = vsel %vm349, %v437, %v439
        %v443 = vsel %vm193, %v426, 0
        %v446 = vsel %vm193, %v427, 0
        %448 = vmatprep.subr.bf16.mxu0 0
        %449 = vmatpush1.bf16.msra.mxu0 0
        %450 = vmatprep.subr.bf16.mxu0 0
        %451 = vmatpush1.bf16.msra.mxu0 0
        %452 = vmatprep.subr.bf16.mxu0 0
        %453 = vmatpush1.bf16.msra.mxu0 0
        %454 = vmatprep.subr.bf16.mxu0 0
        %455 = vmatpush1.bf16.msra.mxu0 0
        %456 = vmatprep.subr.bf16.mxu0 0
        %457 = vmatpush1.bf16.msra.mxu0 0
        %458 = vmatprep.subr.bf16.mxu0 0
        %459 = vmatpush1.bf16.msra.mxu0 0
        %460 = vmatprep.subr.bf16.mxu0 0
        %461 = vmatpush1.bf16.msra.mxu0 0
        %462 = vmatprep.subr.bf16.mxu0 0
        %463 = vmatpush1.bf16.msra.mxu0 %v440
        %464 = vmatprep.subr.bf16.mxu0 0
        %465 = vmatpush2.bf16.msra.mxu0 0
        %466 = vmatprep.subr.bf16.mxu0 0
        %467 = vmatpush2.bf16.msra.mxu0 0
        %468 = vmatprep.subr.bf16.mxu0 0
        %469 = vmatpush2.bf16.msra.mxu0 0
        %470 = vmatprep.subr.bf16.mxu0 0
        %471 = vmatpush2.bf16.msra.mxu0 0
        %472 = vmatprep.subr.bf16.mxu0 0
        %473 = vmatpush2.bf16.msra.mxu0 0
        %474 = vmatprep.subr.bf16.mxu0 0
        %475 = vmatpush2.bf16.msra.mxu0 0
        %476 = vmatprep.subr.bf16.mxu0 0
        %477 = vmatpush2.bf16.msra.mxu0 0
        %478 = vmatprep.subr.bf16.mxu0 0
        %479 = vmatpush2.bf16.msra.mxu0 0
        %480 = vmatprep.mubr.bf16.mxu0 0
        %481 = vmatmul.mubr.bf16.gmra.mxu0 %v443
        %v482 = vpop.f32.mrf.mxu0
        %v483 = vadd.f32 0.0, %v482
        %v484 = vpop.f32.mrf.mxu0
        %v485 = vpop.f32.mrf.mxu0
        %v486 = vadd.f32 0.0, %v485
        %v487 = vpop.f32.mrf.mxu0
        %488 = vmatprep.mubr.bf16.mxu0 0
        %489 = vmatmul.mubr.bf16.gmra.mxu0 %v446
        %v490 = vpop.f32.mrf.mxu0
        %v491 = vadd.f32 0.0, %v490
        %v492 = vpop.f32.mrf.mxu0
        %v493 = vpop.f32.mrf.mxu0
        %v494 = vadd.f32 0.0, %v493
        %v495 = vpop.f32.mrf.mxu0
        %496 = vdwg.mxu0
        %v497 = vadd.f32 %v407, %v483
        %v498 = vadd.f32 %v408, %v486
        %v499 = vadd.f32 %v409, %v491
        %v500 = vadd.f32 %v410, %v494
        %s501 = scalar_lea.vmem %s1, 64
        %v502 = vld [vmem:[%s501] sm:$0xf]
        %v503 = vld [vmem:[%s501 + $0x4] sm:$0xf]
        %v504 = vld [vmem:[%s501 + $0x8] sm:$0xf]
        %v505 = vld [vmem:[%s501 + $0xc] sm:$0xf]
        %v510 = vunpack.c.l.b16 %v502
        %v511 = vunpack.c.l.b16 %v503
        %v512 = vunpack.c.l.b16 %v504
        %v513 = vunpack.c.l.b16 %v505
        %v514 = vpack.c.b16 %v511, %v510
        %v515 = vpack.c.b16 %v513, %v512
        %516 = vrot.lane.b32.xlu0 %v343, 126
        %v517 = vpop.permute.xlu0 %516
        %518 = vrot.lane.b32.xlu0 %v344, 126
        %v519 = vpop.permute.xlu0 %518
        %vm520 = vcmask 1031168
        %v521 = vsel %vm520, %v517, %v519
        %v524 = vsel %vm193, %v514, 0
        %v527 = vsel %vm193, %v515, 0
        %529 = vmatprep.subr.bf16.mxu0 0
        %530 = vmatpush1.bf16.msra.mxu0 0
        %531 = vmatprep.subr.bf16.mxu0 0
        %532 = vmatpush1.bf16.msra.mxu0 0
        %533 = vmatprep.subr.bf16.mxu0 0
        %534 = vmatpush1.bf16.msra.mxu0 0
        %535 = vmatprep.subr.bf16.mxu0 0
        %536 = vmatpush1.bf16.msra.mxu0 0
        %537 = vmatprep.subr.bf16.mxu0 0
        %538 = vmatpush1.bf16.msra.mxu0 0
        %539 = vmatprep.subr.bf16.mxu0 0
        %540 = vmatpush1.bf16.msra.mxu0 0
        %541 = vmatprep.subr.bf16.mxu0 0
        %542 = vmatpush1.bf16.msra.mxu0 0
        %543 = vmatprep.subr.bf16.mxu0 0
        %544 = vmatpush1.bf16.msra.mxu0 %v521
        %545 = vmatprep.subr.bf16.mxu0 0
        %546 = vmatpush2.bf16.msra.mxu0 0
        %547 = vmatprep.subr.bf16.mxu0 0
        %548 = vmatpush2.bf16.msra.mxu0 0
        %549 = vmatprep.subr.bf16.mxu0 0
        %550 = vmatpush2.bf16.msra.mxu0 0
        %551 = vmatprep.subr.bf16.mxu0 0
        %552 = vmatpush2.bf16.msra.mxu0 0
        %553 = vmatprep.subr.bf16.mxu0 0
        %554 = vmatpush2.bf16.msra.mxu0 0
        %555 = vmatprep.subr.bf16.mxu0 0
        %556 = vmatpush2.bf16.msra.mxu0 0
        %557 = vmatprep.subr.bf16.mxu0 0
        %558 = vmatpush2.bf16.msra.mxu0 0
        %559 = vmatprep.subr.bf16.mxu0 0
        %560 = vmatpush2.bf16.msra.mxu0 0
        %561 = vmatprep.mubr.bf16.mxu0 0
        %562 = vmatmul.mubr.bf16.gmra.mxu0 %v524
        %v563 = vpop.f32.mrf.mxu0
        %v564 = vadd.f32 0.0, %v563
        %v565 = vpop.f32.mrf.mxu0
        %v566 = vpop.f32.mrf.mxu0
        %v567 = vadd.f32 0.0, %v566
        %v568 = vpop.f32.mrf.mxu0
        %569 = vmatprep.mubr.bf16.mxu0 0
        %570 = vmatmul.mubr.bf16.gmra.mxu0 %v527
        %v571 = vpop.f32.mrf.mxu0
        %v572 = vadd.f32 0.0, %v571
        %v573 = vpop.f32.mrf.mxu0
        %v574 = vpop.f32.mrf.mxu0
        %v575 = vadd.f32 0.0, %v574
        %v576 = vpop.f32.mrf.mxu0
        %577 = vdwg.mxu0
        %v578 = vadd.f32 %v497, %v564
        %v579 = vadd.f32 %v498, %v567
        %v580 = vadd.f32 %v499, %v572
        %v581 = vadd.f32 %v500, %v575
        %v582 = vxor.u32 %v580, 2147483648
        %v583 = vxor.u32 %v581, 2147483648
        %v584 = vmul.f32 %v582, 1.442695
        %v585 = vpow.pop %v584
        %v586 = vmul.f32 %v583, 1.442695
        %v587 = vpow.pop %v586
        %v588 = vadd.f32 %v585, 1.0
        %v589 = vadd.f32 %v587, 1.0
        %v590 = vrcp.pop %v588
        %v591 = vmul.f32 1.0, %v590
        %v592 = vrcp.pop %v589
        %v593 = vmul.f32 1.0, %v592
        %v594 = vmul.f32 %v578, %v591
        %v595 = vmul.f32 %v579, %v593
        %v596 = vpack.c.bf16 %v595, %v594
        %v598 = vunpack.c.l.b16 %v596
        %v599 = vunpack.c.h.b16 %v596
        %v600 = vpack.c.b16 %v598, %v598
        %v601 = vpack.c.b16 %v599, %v599
        %604 = vst [vmem:[%s155] sm:$0xf] %v600
        %605 = vst [vmem:[%s155 + $0x4] sm:$0xf] %v601
        %s606 = sand.u32 %s87, 1
        %s607 = scalar_lea.sflag [#allocation3], %s606
        %s608 = sand.u32 %s87, 1
        %s609 = smul.addr %s608, 8
        %s610 = scalar_lea.vmem [#allocation2], %s609
        // Predicated region
        $region29: #{tpu_custom_call.1} parent=27 // pred_check
          %p611 = pneg %p97
        $region30: #{tpu_custom_call.1} parent=27 // pred_check_branch
          %613 = sbr.rel (%p611) target = $region32
        $region31: #{tpu_custom_call.1} parent=27 // pred_region
          %s615 = ssub.s32 128, 128
          %616 = vsyncadd %s607, %s615
          %s617 = smul.addr %s20, 2
          %s618 = sadd.s32 %s21, %s617
          %s619 = smul.addr %s618, 64
          %s620 = scalar_lea.hbm %s2, %s619
          %s621 = sshll.u32 %s610, 4
          %s622 = int_to_ptr.vmem [resolvable:$true] %s621
          %627 = dma.vmem_to_hbm [thread:$0]  %s622, 128, %s620, %s607, 64, 64, 4
        $region32: #{tpu_custom_call.1} parent=27 // pred_fallthru
          _
      $region28: #{tpu_custom_call.1} parent=5 // pred_fallthru
        _
      %p628 = scmp.le.s32.totalorder 2, %s11
      // Predicated region
      $region33: #{tpu_custom_call.1} parent=5 // pred_check
        %p629 = pneg %p628
      $region34: #{tpu_custom_call.1} parent=5 // pred_check_branch
        %631 = sbr.rel (%p629) target = $region36
      $region35: #{tpu_custom_call.1} parent=5 // pred_region
        %s632 = ssub.s32 %s11, 2
        // Predicated region
        $region37: #{tpu_custom_call.1} parent=35 // pred_check
          %p633 = pneg %p103
        $region38: #{tpu_custom_call.1} parent=35 // pred_check_branch
          %635 = sbr.rel (%p633) target = $region40
        $region39: #{tpu_custom_call.1} parent=35 // pred_region
          %s636 = sand.u32 %s88, 1
          %s637 = scalar_lea.sflag [#allocation3], %s636
          %s638 = sand.u32 %s88, 1
          %s639 = smul.addr %s638, 8
          %s640 = scalar_lea.vmem [#allocation2], %s639
          %641 = dma.done %s637, 128
        $region40: #{tpu_custom_call.1} parent=35 // pred_fallthru
          _
      $region36: #{tpu_custom_call.1} parent=5 // pred_fallthru
        _
    $region6: #{tpu_custom_call.1} parent=1 // loop_footer
      %s15 = sadd.s32 1, %s11
    $region7: #{tpu_custom_call.1} parent=1 // loop_footer_branch
      %10 = sbr.rel target = $region3
    $region8: #{tpu_custom_call.1} parent=1 // loop_exit
      _
    %642 = vsyncpa [#allocation3], 1
    %s643 = scalar_lea.sflag [#allocation3], 1
    %644 = vsyncpa %s643, 1

// kernel: tpu_custom_call.1
$region0: #{tpu_custom_call.1}
  #allocation0 [shape = 'u32[]', space=smem, size = 0x4, offset = 0x4, fixed_abs, tag = 'smem constant byte address 0x4 - core index']
  #allocation1 [shape = 'u32[144,128]{1,0:T(1,128)}', space=vmem, size = 0x12000, scoped, tag = 'internal scratch']
  %s0 = inlined_call_operand.vmem [shape: bf16[2,32,136], index: 0, kind: input, shape index: {}]
  %s1 = inlined_call_operand.vmem [shape: bf16[5,32,16], index: 1, kind: input, shape index: {}]
  %s2 = inlined_call_operand.hbm [shape: bf16[2,16,128], index: 2, kind: output, shape index: {}]
  %s3 = sld [smem:[#allocation0]]
  $region41: #{tpu_custom_call.1} parent=0
    _
  %s5 = ssub.s32 1, %s3
  %s6 = scalar_select 0, %s5, %s3
  $region1: #{tpu_custom_call.1} parent=0
    #allocation2 [shape = 'u8[8192]{0}', space=vmem, size = 0x2000, scoped, tag = 'output window, operand 0']
    #allocation3 [shape = 's32[2]{0}', space=sflag, size = 0x8, scoped, tag = 'scoped memory for tpu_custom_call.1']
    %7 = vsyncpa [#allocation3], 0
    %s8 = scalar_lea.sflag [#allocation3], 1
    %9 = vsyncpa %s8, 0
    loop: start=0, step=1, limit=4
    $region2: #{tpu_custom_call.1} parent=1 // loop_pre_header
      _
    $region3: #{tpu_custom_call.1} parent=1 // loop_header
      %s11 = sphi 0, %s15
      %p12 = scmp.ge.s32.totalorder %s11, 4
      %s18 = sphi 0, %s30
      %s19 = sphi 0, %s26
      %s20 = sphi 0, %s18
      %s21 = sphi 0, %s19
      %s22 = sphi 0, %s20
      %s23 = sphi 0, %s21
      %s35 = sphi 0, %s37
      %s38 = sphi 0, %s35
      %s39 = sphi 0, %s38
      %s55 = sphi 0, %s39
      %s59 = sphi 0, %s59
      %s61 = sphi 0, %s59
      %s62 = sphi 0, %s61
      %s76 = sphi 0, %s62
      %s84 = sphi 0, %s86
      %s87 = sphi 0, %s84
      %s88 = sphi 0, %s87
      %s104 = sphi 0, %s88
    $region4: #{tpu_custom_call.1} parent=1 // loop_header_branch
      %14 = sbr.rel (%p12) target = $region8
    $region5: #{tpu_custom_call.1} parent=1 // loop_body
      %s16 = ssub.s32 %s11, 1
      %s17 = ssub.s32 %s11, 2
      %s24 = sadd.s32 1, %s19
      %p25 = scmp.ge.s32.totalorder %s24, 1
      %s26 = scalar_select %p25, 0, %s24
      %s27 = sadd.s32 1, %s18
      %s28 = scalar_select %p25, %s27, %s18
      %p29 = scmp.ge.s32.totalorder %s28, 2
      %s30 = scalar_select %p29, 0, %s28
      %s31 = sadd.s32 %s18, %s19
      %s32 = sadd.s32 %s30, %s26
      %s33 = ssub.s32 %s31, %s32
      %p34 = scmp.eq.s32.totalorder %s33, 0
      %s36 = sadd.s32 %s35, 1
      %s37 = scalar_select %p34, %s35, %s36
      %p40 = pneg %p34
      %p41 = scmp.eq.s32.totalorder %s11, 1
      %p42 = por %p40, %p41
      %p43 = scmp.ne.s32.totalorder %s35, %s38
      %p44 = scmp.eq.s32.totalorder %s11, 0
      %p45 = por %p43, %p44
      %p46 = scmp.ne.s32.totalorder %s35, %s38
      %p47 = scmp.eq.s32.totalorder %s16, 1
      %p48 = por %p46, %p47
      %p49 = scmp.ne.s32.totalorder %s38, %s39
      %p50 = scmp.eq.s32.totalorder %s16, 0
      %p51 = por %p49, %p50
      %p52 = scmp.ne.s32.totalorder %s38, %s39
      %p53 = scmp.eq.s32.totalorder %s17, 1
      %p54 = por %p52, %p53
      %p56 = scmp.ne.s32.totalorder %s39, %s55
      %p57 = scmp.eq.s32.totalorder %s17, 0
      %p58 = por %p56, %p57
      %s60 = sadd.s32 %s59, 1
      %p63 = scmp.eq.s32.totalorder %s11, 1
      %p64 = scmp.ne.s32.totalorder %s59, %s61
      %p65 = scmp.eq.s32.totalorder %s11, 0
      %p66 = por %p64, %p65
      %p67 = scmp.ne.s32.totalorder %s59, %s61
      %p68 = scmp.eq.s32.totalorder %s16, 1
      %p69 = por %p67, %p68
      %p70 = scmp.ne.s32.totalorder %s61, %s62
      %p71 = scmp.eq.s32.totalorder %s16, 0
      %p72 = por %p70, %p71
      %p73 = scmp.ne.s32.totalorder %s61, %s62
      %p74 = scmp.eq.s32.totalorder %s17, 1
      %p75 = por %p73, %p74
      %p77 = scmp.ne.s32.totalorder %s62, %s76
      %p78 = scmp.eq.s32.totalorder %s17, 0
      %p79 = por %p77, %p78
      %s80 = ssub.s32 %s18, %s30
      %s81 = ssub.s32 %s19, %s26
      %s82 = sor.u32 %s80, %s81
      %p83 = scmp.eq.s32.totalorder %s82, 0
      %s85 = sadd.s32 %s84, 1
      %s86 = scalar_select %p83, %s84, %s85
      %p89 = pneg %p83
      %p90 = scmp.eq.s32.totalorder %s11, 1
      %p91 = por %p89, %p90
      %p92 = scmp.ne.s32.totalorder %s84, %s87
      %p93 = scmp.eq.s32.totalorder %s11, 0
      %p94 = por %p92, %p93
      %p95 = scmp.ne.s32.totalorder %s84, %s87
      %p96 = scmp.eq.s32.totalorder %s16, 1
      %p97 = por %p95, %p96
      %p98 = scmp.ne.s32.totalorder %s87, %s88
      %p99 = scmp.eq.s32.totalorder %s16, 0
      %p100 = por %p98, %p99
      %p101 = scmp.ne.s32.totalorder %s87, %s88
      %p102 = scmp.eq.s32.totalorder %s17, 1
      %p103 = por %p101, %p102
      %p105 = scmp.ne.s32.totalorder %s88, %s104
      %p106 = scmp.eq.s32.totalorder %s17, 0
      %p107 = por %p105, %p106
      %p108 = scmp.le.s32.totalorder 1, %s11
      %p109 = scmp.lt.s32.totalorder %s11, 3
      %p110 = pnand %p108, %p109
      %p111 = pneg %p110
      // Predicated region
      $region9: #{tpu_custom_call.1} parent=5 // pred_check
        _
      $region10: #{tpu_custom_call.1} parent=5 // pred_check_branch
        %113 = sbr.rel (%p110) target = $region12
      $region11: #{tpu_custom_call.1} parent=5 // pred_region
        %s114 = ssub.s32 %s11, 1
        // Predicated region
        $region13: #{tpu_custom_call.1} parent=11 // pred_check
          %p115 = pneg %p72
        $region14: #{tpu_custom_call.1} parent=11 // pred_check_branch
          %117 = sbr.rel (%p115) target = $region16
        $region15: #{tpu_custom_call.1} parent=11 // pred_region
          _
        $region16: #{tpu_custom_call.1} parent=11 // pred_fallthru
          _
      $region12: #{tpu_custom_call.1} parent=5 // pred_fallthru
        _
      %p118 = scmp.lt.s32.totalorder %s11, 2
      // Predicated region
      $region17: #{tpu_custom_call.1} parent=5 // pred_check
        %p119 = pneg %p118
      $region18: #{tpu_custom_call.1} parent=5 // pred_check_branch
        %121 = sbr.rel (%p119) target = $region20
      $region19: #{tpu_custom_call.1} parent=5 // pred_region
        // Predicated region
        $region21: #{tpu_custom_call.1} parent=19 // pred_check
          %p122 = pneg %p45
        $region22: #{tpu_custom_call.1} parent=19 // pred_check_branch
          %124 = sbr.rel (%p122) target = $region24
        $region23: #{tpu_custom_call.1} parent=19 // pred_region
          %s125 = sadd.s32 %s18, %s19
          %p126 = scmp.lt.s32.totalorder %s125, 1
          %s127 = scalar_select %p126, %s125, 1
          %s128 = smul.addr %s127, 8
          %s129 = smul.addr %s128, 4
          %s130 = scalar_lea.vmem %s0, %s129
          %s131 = sadd.s32 %s18, %s19
        $region24: #{tpu_custom_call.1} parent=19 // pred_fallthru
          _
      $region20: #{tpu_custom_call.1} parent=5 // pred_fallthru
        _
      %p132 = scmp.le.s32.totalorder 1, %s11
      %p133 = scmp.lt.s32.totalorder %s11, 3
      %p134 = pnand %p132, %p133
      %p135 = pneg %p134
      // Predicated region
      $region25: #{tpu_custom_call.1} parent=5 // pred_check
        _
      $region26: #{tpu_custom_call.1} parent=5 // pred_check_branch
        %137 = sbr.rel (%p134) target = $region28
      $region27: #{tpu_custom_call.1} parent=5 // pred_region
        %s138 = ssub.s32 %s11, 1
        %s139 = sadd.s32 %s20, %s21
        %p140 = scmp.lt.s32.totalorder %s139, 1
        %s141 = scalar_select %p140, %s139, 1
        %s142 = smul.addr %s141, 8
        %s143 = smul.addr %s142, 4
        %s144 = scalar_lea.vmem %s0, %s143
        %p145 = pneg %p51
        %p146 = pneg %p48
        %p147 = pneg %p72
        %p148 = pneg %p69
        %p149 = pneg %p100
        %p150 = pneg %p97
        %s151 = sand.u32 %s87, 1
        %s152 = scalar_lea.sflag [#allocation3], %s151
        %s153 = sand.u32 %s87, 1
        %s154 = smul.addr %s153, 8
        %s155 = scalar_lea.vmem [#allocation2], %s154
        %s156 = sadd.s32 %s20, %s21
        %p157 = scmp.lt.s32.totalorder %s156, 1
        %s158 = scalar_select %p157, %s156, 1
        %s159 = smul.addr %s158, 8
        %s160 = smul.addr %s159, 4
        %s161 = scalar_lea.vmem %s0, %s160
        %s162 = sadd.s32 %s20, %s21
        %v164 = vld [vmem:[%s161] sm:$0xf]
        %v165 = vld [vmem:[%s161 + $0x8] sm:$0xf]
        %v166 = vld [vmem:[%s1] sm:$0xf]
        %v167 = vld [vmem:[%s1 + $0x4] sm:$0xf]
        %v168 = vld [vmem:[%s1 + $0x8] sm:$0xf]
        %v169 = vld [vmem:[%s1 + $0xc] sm:$0xf]
        %v170 = vld [vmem:[%s161 + $0x10] sm:$0xf]
        %v171 = vld [vmem:[%s161 + $0x18] sm:$0xf]
        %s172 = scalar_lea.vmem %s1, 16
        %v173 = vld [vmem:[%s172] sm:$0xf]
        %v174 = vld [vmem:[%s172 + $0x4] sm:$0xf]
        %v175 = vld [vmem:[%s172 + $0x8] sm:$0xf]
        %v176 = vld [vmem:[%s172 + $0xc] sm:$0xf]
        %v181 = vunpack.c.l.b16 %v173
        %v182 = vunpack.c.l.b16 %v174
        %v183 = vunpack.c.l.b16 %v175
        %v184 = vunpack.c.l.b16 %v176
        %v185 = vpack.c.b16 %v182, %v181
        %v186 = vpack.c.b16 %v184, %v183
        %v189 = vunpack.c.l.b16 %v170
        %v190 = vunpack.c.l.b16 %v171
        %v191 = vpack.c.b16 %v190, %v189
        %vm193 = vcmask 130048
        %v195 = vsel %vm193, %v185, 0
        %v198 = vsel %vm193, %v186, 0
        %200 = vmatprep.subr.bf16.mxu0 0
        %201 = vmatpush1.bf16.msra.mxu0 0
        %202 = vmatprep.subr.bf16.mxu0 0
        %203 = vmatpush1.bf16.msra.mxu0 0
        %204 = vmatprep.subr.bf16.mxu0 0
        %205 = vmatpush1.bf16.msra.mxu0 0
        %206 = vmatprep.subr.bf16.mxu0 0
        %207 = vmatpush1.bf16.msra.mxu0 0
        %208 = vmatprep.subr.bf16.mxu0 0
        %209 = vmatpush1.bf16.msra.mxu0 0
        %210 = vmatprep.subr.bf16.mxu0 0
        %211 = vmatpush1.bf16.msra.mxu0 0
        %212 = vmatprep.subr.bf16.mxu0 0
        %213 = vmatpush1.bf16.msra.mxu0 0
        %214 = vmatprep.subr.bf16.mxu0 0
        %215 = vmatpush1.bf16.msra.mxu0 %v191
        %216 = vmatprep.subr.bf16.mxu0 0
        %217 = vmatpush2.bf16.msra.mxu0 0
        %218 = vmatprep.subr.bf16.mxu0 0
        %219 = vmatpush2.bf16.msra.mxu0 0
        %220 = vmatprep.subr.bf16.mxu0 0
        %221 = vmatpush2.bf16.msra.mxu0 0
        %222 = vmatprep.subr.bf16.mxu0 0
        %223 = vmatpush2.bf16.msra.mxu0 0
        %224 = vmatprep.subr.bf16.mxu0 0
        %225 = vmatpush2.bf16.msra.mxu0 0
        %226 = vmatprep.subr.bf16.mxu0 0
        %227 = vmatpush2.bf16.msra.mxu0 0
        %228 = vmatprep.subr.bf16.mxu0 0
        %229 = vmatpush2.bf16.msra.mxu0 0
        %230 = vmatprep.subr.bf16.mxu0 0
        %231 = vmatpush2.bf16.msra.mxu0 0
        %232 = vmatprep.mubr.bf16.mxu0 0
        %233 = vmatmul.mubr.bf16.gmra.mxu0 %v195
        %v234 = vpop.f32.mrf.mxu0
        %v235 = vadd.f32 0.0, %v234
        %v236 = vpop.f32.mrf.mxu0
        %v237 = vpop.f32.mrf.mxu0
        %v238 = vadd.f32 0.0, %v237
        %v239 = vpop.f32.mrf.mxu0
        %240 = vmatprep.mubr.bf16.mxu0 0
        %241 = vmatmul.mubr.bf16.gmra.mxu0 %v198
        %v242 = vpop.f32.mrf.mxu0
        %v243 = vadd.f32 0.0, %v242
        %v244 = vpop.f32.mrf.mxu0
        %v245 = vpop.f32.mrf.mxu0
        %v246 = vadd.f32 0.0, %v245
        %v247 = vpop.f32.mrf.mxu0
        %248 = vdwg.mxu0
        %v253 = vunpack.c.l.b16 %v166
        %v254 = vunpack.c.l.b16 %v167
        %v255 = vunpack.c.l.b16 %v168
        %v256 = vunpack.c.l.b16 %v169
        %v257 = vpack.c.b16 %v254, %v253
        %v258 = vpack.c.b16 %v256, %v255
        %v261 = vunpack.c.l.b16 %v164
        %v262 = vunpack.c.l.b16 %v165
        %v263 = vpack.c.b16 %v262, %v261
        %v266 = vsel %vm193, %v257, 0
        %v269 = vsel %vm193, %v258, 0
        %271 = vmatprep.subr.bf16.mxu0 0
        %272 = vmatpush1.bf16.msra.mxu0 0
        %273 = vmatprep.subr.bf16.mxu0 0
        %274 = vmatpush1.bf16.msra.mxu0 0
        %275 = vmatprep.subr.bf16.mxu0 0
        %276 = vmatpush1.bf16.msra.mxu0 0
        %277 = vmatprep.subr.bf16.mxu0 0
        %278 = vmatpush1.bf16.msra.mxu0 0
        %279 = vmatprep.subr.bf16.mxu0 0
        %280 = vmatpush1.bf16.msra.mxu0 0
        %281 = vmatprep.subr.bf16.mxu0 0
        %282 = vmatpush1.bf16.msra.mxu0 0
        %283 = vmatprep.subr.bf16.mxu0 0
        %284 = vmatpush1.bf16.msra.mxu0 0
        %285 = vmatprep.subr.bf16.mxu0 0
        %286 = vmatpush1.bf16.msra.mxu0 %v263
        %287 = vmatprep.subr.bf16.mxu0 0
        %288 = vmatpush2.bf16.msra.mxu0 0
        %289 = vmatprep.subr.bf16.mxu0 0
        %290 = vmatpush2.bf16.msra.mxu0 0
        %291 = vmatprep.subr.bf16.mxu0 0
        %292 = vmatpush2.bf16.msra.mxu0 0
        %293 = vmatprep.subr.bf16.mxu0 0
        %294 = vmatpush2.bf16.msra.mxu0 0
        %295 = vmatprep.subr.bf16.mxu0 0
        %296 = vmatpush2.bf16.msra.mxu0 0
        %297 = vmatprep.subr.bf16.mxu0 0
        %298 = vmatpush2.bf16.msra.mxu0 0
        %299 = vmatprep.subr.bf16.mxu0 0
        %300 = vmatpush2.bf16.msra.mxu0 0
        %301 = vmatprep.subr.bf16.mxu0 0
        %302 = vmatpush2.bf16.msra.mxu0 0
        %303 = vmatprep.mubr.bf16.mxu0 0
        %304 = vmatmul.mubr.bf16.gmra.mxu0 %v266
        %v305 = vpop.f32.mrf.mxu0
        %v306 = vadd.f32 %v235, %v305
        %v307 = vpop.f32.mrf.mxu0
        %v308 = vpop.f32.mrf.mxu0
        %v309 = vadd.f32 %v238, %v308
        %v310 = vpop.f32.mrf.mxu0
        %311 = vmatprep.mubr.bf16.mxu0 0
        %312 = vmatmul.mubr.bf16.gmra.mxu0 %v269
        %v313 = vpop.f32.mrf.mxu0
        %v314 = vadd.f32 %v243, %v313
        %v315 = vpop.f32.mrf.mxu0
        %v316 = vpop.f32.mrf.mxu0
        %v317 = vadd.f32 %v246, %v316
        %v318 = vpop.f32.mrf.mxu0
        %319 = vdwg.mxu0
        %v320 = vld [vmem:[%s161] sm:$0xff]
        %v321 = vld [vmem:[%s161 + $0x8] sm:$0xff]
        %s322 = scalar_lea.vmem %s1, 32
        %v323 = vld [vmem:[%s322] sm:$0xf]
        %v324 = vld [vmem:[%s322 + $0x4] sm:$0xf]
        %v325 = vld [vmem:[%s322 + $0x8] sm:$0xf]
        %v326 = vld [vmem:[%s322 + $0xc] sm:$0xf]
        %v331 = vunpack.c.l.b16 %v323
        %v332 = vunpack.c.l.b16 %v324
        %v333 = vunpack.c.l.b16 %v325
        %v334 = vunpack.c.l.b16 %v326
        %v335 = vpack.c.b16 %v332, %v331
        %v336 = vpack.c.b16 %v334, %v333
        %v339 = vunpack.c.l.b16 %v320
        %v340 = vunpack.c.h.b16 %v320
        %v341 = vunpack.c.l.b16 %v321
        %v342 = vunpack.c.h.b16 %v321
        %v343 = vpack.c.b16 %v341, %v339
        %v344 = vpack.c.b16 %v342, %v340
        %345 = vrot.lane.b32.xlu0 %v343, 127
        %v346 = vpop.permute.xlu0 %345
        %347 = vrot.lane.b32.xlu0 %v344, 127
        %v348 = vpop.permute.xlu0 %347
        %vm349 = vcmask 1039360
        %v350 = vsel %vm349, %v346, %v348
        %v353 = vsel %vm193, %v335, 0
        %v356 = vsel %vm193, %v336, 0
        %358 = vmatprep.subr.bf16.mxu0 0
        %359 = vmatpush1.bf16.msra.mxu0 0
        %360 = vmatprep.subr.bf16.mxu0 0
        %361 = vmatpush1.bf16.msra.mxu0 0
        %362 = vmatprep.subr.bf16.mxu0 0
        %363 = vmatpush1.bf16.msra.mxu0 0
        %364 = vmatprep.subr.bf16.mxu0 0
        %365 = vmatpush1.bf16.msra.mxu0 0
        %366 = vmatprep.subr.bf16.mxu0 0
        %367 = vmatpush1.bf16.msra.mxu0 0
        %368 = vmatprep.subr.bf16.mxu0 0
        %369 = vmatpush1.bf16.msra.mxu0 0
        %370 = vmatprep.subr.bf16.mxu0 0
        %371 = vmatpush1.bf16.msra.mxu0 0
        %372 = vmatprep.subr.bf16.mxu0 0
        %373 = vmatpush1.bf16.msra.mxu0 %v350
        %374 = vmatprep.subr.bf16.mxu0 0
        %375 = vmatpush2.bf16.msra.mxu0 0
        %376 = vmatprep.subr.bf16.mxu0 0
        %377 = vmatpush2.bf16.msra.mxu0 0
        %378 = vmatprep.subr.bf16.mxu0 0
        %379 = vmatpush2.bf16.msra.mxu0 0
        %380 = vmatprep.subr.bf16.mxu0 0
        %381 = vmatpush2.bf16.msra.mxu0 0
        %382 = vmatprep.subr.bf16.mxu0 0
        %383 = vmatpush2.bf16.msra.mxu0 0
        %384 = vmatprep.subr.bf16.mxu0 0
        %385 = vmatpush2.bf16.msra.mxu0 0
        %386 = vmatprep.subr.bf16.mxu0 0
        %387 = vmatpush2.bf16.msra.mxu0 0
        %388 = vmatprep.subr.bf16.mxu0 0
        %389 = vmatpush2.bf16.msra.mxu0 0
        %390 = vmatprep.mubr.bf16.mxu0 0
        %391 = vmatmul.mubr.bf16.gmra.mxu0 %v353
        %v392 = vpop.f32.mrf.mxu0
        %v393 = vadd.f32 0.0, %v392
        %v394 = vpop.f32.mrf.mxu0
        %v395 = vpop.f32.mrf.mxu0
        %v396 = vadd.f32 0.0, %v395
        %v397 = vpop.f32.mrf.mxu0
        %398 = vmatprep.mubr.bf16.mxu0 0
        %399 = vmatmul.mubr.bf16.gmra.mxu0 %v356
        %v400 = vpop.f32.mrf.mxu0
        %v401 = vadd.f32 0.0, %v400
        %v402 = vpop.f32.mrf.mxu0
        %v403 = vpop.f32.mrf.mxu0
        %v404 = vadd.f32 0.0, %v403
        %v405 = vpop.f32.mrf.mxu0
        %406 = vdwg.mxu0
        %v407 = vadd.f32 %v306, %v393
        %v408 = vadd.f32 %v309, %v396
        %v409 = vadd.f32 %v314, %v401
        %v410 = vadd.f32 %v317, %v404
        %v411 = vld [vmem:[%s161 + $0x10] sm:$0xff]
        %v412 = vld [vmem:[%s161 + $0x18] sm:$0xff]
        %s413 = scalar_lea.vmem %s1, 48
        %v414 = vld [vmem:[%s413] sm:$0xf]
        %v415 = vld [vmem:[%s413 + $0x4] sm:$0xf]
        %v416 = vld [vmem:[%s413 + $0x8] sm:$0xf]
        %v417 = vld [vmem:[%s413 + $0xc] sm:$0xf]
        %v422 = vunpack.c.l.b16 %v414
        %v423 = vunpack.c.l.b16 %v415
        %v424 = vunpack.c.l.b16 %v416
        %v425 = vunpack.c.l.b16 %v417
        %v426 = vpack.c.b16 %v423, %v422
        %v427 = vpack.c.b16 %v425, %v424
        %v430 = vunpack.c.l.b16 %v411
        %v431 = vunpack.c.h.b16 %v411
        %v432 = vunpack.c.l.b16 %v412
        %v433 = vunpack.c.h.b16 %v412
        %v434 = vpack.c.b16 %v432, %v430
        %v435 = vpack.c.b16 %v433, %v431
        %436 = vrot.lane.b32.xlu0 %v434, 127
        %v437 = vpop.permute.xlu0 %436
        %438 = vrot.lane.b32.xlu0 %v435, 127
        %v439 = vpop.permute.xlu0 %438
        %v440 = vsel %vm349, %v437, %v439
        %v443 = vsel %vm193, %v426, 0
        %v446 = vsel %vm193, %v427, 0
        %448 = vmatprep.subr.bf16.mxu0 0
        %449 = vmatpush1.bf16.msra.mxu0 0
        %450 = vmatprep.subr.bf16.mxu0 0
        %451 = vmatpush1.bf16.msra.mxu0 0
        %452 = vmatprep.subr.bf16.mxu0 0
        %453 = vmatpush1.bf16.msra.mxu0 0
        %454 = vmatprep.subr.bf16.mxu0 0
        %455 = vmatpush1.bf16.msra.mxu0 0
        %456 = vmatprep.subr.bf16.mxu0 0
        %457 = vmatpush1.bf16.msra.mxu0 0
        %458 = vmatprep.subr.bf16.mxu0 0
        %459 = vmatpush1.bf16.msra.mxu0 0
        %460 = vmatprep.subr.bf16.mxu0 0
        %461 = vmatpush1.bf16.msra.mxu0 0
        %462 = vmatprep.subr.bf16.mxu0 0
        %463 = vmatpush1.bf16.msra.mxu0 %v440
        %464 = vmatprep.subr.bf16.mxu0 0
        %465 = vmatpush2.bf16.msra.mxu0 0
        %466 = vmatprep.subr.bf16.mxu0 0
        %467 = vmatpush2.bf16.msra.mxu0 0
        %468 = vmatprep.subr.bf16.mxu0 0
        %469 = vmatpush2.bf16.msra.mxu0 0
        %470 = vmatprep.subr.bf16.mxu0 0
        %471 = vmatpush2.bf16.msra.mxu0 0
        %472 = vmatprep.subr.bf16.mxu0 0
        %473 = vmatpush2.bf16.msra.mxu0 0
        %474 = vmatprep.subr.bf16.mxu0 0
        %475 = vmatpush2.bf16.msra.mxu0 0
        %476 = vmatprep.subr.bf16.mxu0 0
        %477 = vmatpush2.bf16.msra.mxu0 0
        %478 = vmatprep.subr.bf16.mxu0 0
        %479 = vmatpush2.bf16.msra.mxu0 0
        %480 = vmatprep.mubr.bf16.mxu0 0
        %481 = vmatmul.mubr.bf16.gmra.mxu0 %v443
        %v482 = vpop.f32.mrf.mxu0
        %v483 = vadd.f32 0.0, %v482
        %v484 = vpop.f32.mrf.mxu0
        %v485 = vpop.f32.mrf.mxu0
        %v486 = vadd.f32 0.0, %v485
        %v487 = vpop.f32.mrf.mxu0
        %488 = vmatprep.mubr.bf16.mxu0 0
        %489 = vmatmul.mubr.bf16.gmra.mxu0 %v446
        %v490 = vpop.f32.mrf.mxu0
        %v491 = vadd.f32 0.0, %v490
        %v492 = vpop.f32.mrf.mxu0
        %v493 = vpop.f32.mrf.mxu0
        %v494 = vadd.f32 0.0, %v493
        %v495 = vpop.f32.mrf.mxu0
        %496 = vdwg.mxu0
        %v497 = vadd.f32 %v407, %v483
        %v498 = vadd.f32 %v408, %v486
        %v499 = vadd.f32 %v409, %v491
        %v500 = vadd.f32 %v410, %v494
        %s501 = scalar_lea.vmem %s1, 64
        %v502 = vld [vmem:[%s501] sm:$0xf]
        %v503 = vld [vmem:[%s501 + $0x4] sm:$0xf]
        %v504 = vld [vmem:[%s501 + $0x8] sm:$0xf]
        %v505 = vld [vmem:[%s501 + $0xc] sm:$0xf]
        %v510 = vunpack.c.l.b16 %v502
        %v511 = vunpack.c.l.b16 %v503
        %v512 = vunpack.c.l.b16 %v504
        %v513 = vunpack.c.l.b16 %v505
        %v514 = vpack.c.b16 %v511, %v510
        %v515 = vpack.c.b16 %v513, %v512
        %516 = vrot.lane.b32.xlu0 %v343, 126
        %v517 = vpop.permute.xlu0 %516
        %518 = vrot.lane.b32.xlu0 %v344, 126
        %v519 = vpop.permute.xlu0 %518
        %vm520 = vcmask 1031168
        %v521 = vsel %vm520, %v517, %v519
        %v524 = vsel %vm193, %v514, 0
        %v527 = vsel %vm193, %v515, 0
        %529 = vmatprep.subr.bf16.mxu0 0
        %530 = vmatpush1.bf16.msra.mxu0 0
        %531 = vmatprep.subr.bf16.mxu0 0
        %532 = vmatpush1.bf16.msra.mxu0 0
        %533 = vmatprep.subr.bf16.mxu0 0
        %534 = vmatpush1.bf16.msra.mxu0 0
        %535 = vmatprep.subr.bf16.mxu0 0
        %536 = vmatpush1.bf16.msra.mxu0 0
        %537 = vmatprep.subr.bf16.mxu0 0
        %538 = vmatpush1.bf16.msra.mxu0 0
        %539 = vmatprep.subr.bf16.mxu0 0
        %540 = vmatpush1.bf16.msra.mxu0 0
        %541 = vmatprep.subr.bf16.mxu0 0
        %542 = vmatpush1.bf16.msra.mxu0 0
        %543 = vmatprep.subr.bf16.mxu0 0
        %544 = vmatpush1.bf16.msra.mxu0 %v521
        %545 = vmatprep.subr.bf16.mxu0 0
        %546 = vmatpush2.bf16.msra.mxu0 0
        %547 = vmatprep.subr.bf16.mxu0 0
        %548 = vmatpush2.bf16.msra.mxu0 0
        %549 = vmatprep.subr.bf16.mxu0 0
        %550 = vmatpush2.bf16.msra.mxu0 0
        %551 = vmatprep.subr.bf16.mxu0 0
        %552 = vmatpush2.bf16.msra.mxu0 0
        %553 = vmatprep.subr.bf16.mxu0 0
        %554 = vmatpush2.bf16.msra.mxu0 0
        %555 = vmatprep.subr.bf16.mxu0 0
        %556 = vmatpush2.bf16.msra.mxu0 0
        %557 = vmatprep.subr.bf16.mxu0 0
        %558 = vmatpush2.bf16.msra.mxu0 0
        %559 = vmatprep.subr.bf16.mxu0 0
        %560 = vmatpush2.bf16.msra.mxu0 0
        %561 = vmatprep.mubr.bf16.mxu0 0
        %562 = vmatmul.mubr.bf16.gmra.mxu0 %v524
        %v563 = vpop.f32.mrf.mxu0
        %v564 = vadd.f32 0.0, %v563
        %v565 = vpop.f32.mrf.mxu0
        %v566 = vpop.f32.mrf.mxu0
        %v567 = vadd.f32 0.0, %v566
        %v568 = vpop.f32.mrf.mxu0
        %569 = vmatprep.mubr.bf16.mxu0 0
        %570 = vmatmul.mubr.bf16.gmra.mxu0 %v527
        %v571 = vpop.f32.mrf.mxu0
        %v572 = vadd.f32 0.0, %v571
        %v573 = vpop.f32.mrf.mxu0
        %v574 = vpop.f32.mrf.mxu0
        %v575 = vadd.f32 0.0, %v574
        %v576 = vpop.f32.mrf.mxu0
        %577 = vdwg.mxu0
        %v578 = vadd.f32 %v497, %v564
        %v579 = vadd.f32 %v498, %v567
        %v580 = vadd.f32 %v499, %v572
        %v581 = vadd.f32 %v500, %v575
        %v582 = vxor.u32 %v580, 2147483648
        %v583 = vxor.u32 %v581, 2147483648
        %v584 = vmul.f32 %v582, 1.442695
        %v585 = vpow.pop %v584
        %v586 = vmul.f32 %v583, 1.442695
        %v587 = vpow.pop %v586
        %v588 = vadd.f32 %v585, 1.0
        %v589 = vadd.f32 %v587, 1.0
        %v590 = vrcp.pop %v588
        %v591 = vmul.f32 1.0, %v590
        %v592 = vrcp.pop %v589
        %v593 = vmul.f32 1.0, %v592
        %v594 = vmul.f32 %v578, %v591
        %v595 = vmul.f32 %v579, %v593
        %v596 = vpack.c.bf16 %v595, %v594
        %v598 = vunpack.c.l.b16 %v596
        %v599 = vunpack.c.h.b16 %v596
        %v600 = vpack.c.b16 %v598, %v598
        %v601 = vpack.c.b16 %v599, %v599
        %604 = vst [vmem:[%s155] sm:$0xf] %v600
        %605 = vst [vmem:[%s155 + $0x4] sm:$0xf] %v601
        %s606 = sand.u32 %s87, 1
        %s607 = scalar_lea.sflag [#allocation3], %s606
        %s608 = sand.u32 %s87, 1
        %s609 = smul.addr %s608, 8
        %s610 = scalar_lea.vmem [#allocation2], %s609
        // Predicated region
        $region29: #{tpu_custom_call.1} parent=27 // pred_check
          %p611 = pneg %p97
        $region30: #{tpu_custom_call.1} parent=27 // pred_check_branch
          %613 = sbr.rel (%p611) target = $region32
        $region31: #{tpu_custom_call.1} parent=27 // pred_region
          %s615 = ssub.s32 128, 128
          %616 = vsyncadd %s607, %s615
          %s617 = smul.addr %s20, 2
          %s618 = sadd.s32 %s21, %s617
          %s619 = smul.addr %s618, 64
          %s620 = scalar_lea.hbm %s2, %s619
          %s621 = sshll.u32 %s610, 4
          %s622 = int_to_ptr.vmem [resolvable:$true] %s621
          %627 = dma.vmem_to_hbm [thread:$0]  %s622, 128, %s620, %s607, 64, 64, 4
        $region32: #{tpu_custom_call.1} parent=27 // pred_fallthru
          _
      $region28: #{tpu_custom_call.1} parent=5 // pred_fallthru
        _
      %p628 = scmp.le.s32.totalorder 2, %s11
      // Predicated region
      $region33: #{tpu_custom_call.1} parent=5 // pred_check
        %p629 = pneg %p628
      $region34: #{tpu_custom_call.1} parent=5 // pred_check_branch
        %631 = sbr.rel (%p629) target = $region36
      $region35: #{tpu_custom_call.1} parent=5 // pred_region
        %s632 = ssub.s32 %s11, 2
        // Predicated region
        $region37: #{tpu_custom_call.1} parent=35 // pred_check
          %p633 = pneg %p103
        $region38: #{tpu_custom_call.1} parent=35 // pred_check_branch
          %635 = sbr.rel (%p633) target = $region40
        $region39: #{tpu_custom_call.1} parent=35 // pred_region
          %s636 = sand.u32 %s88, 1
          %s637 = scalar_lea.sflag [#allocation3], %s636
          %s638 = sand.u32 %s88, 1
          %s639 = smul.addr %s638, 8
          %s640 = scalar_lea.vmem [#allocation2], %s639
          %641 = dma.done %s637, 128
        $region40: #{tpu_custom_call.1} parent=35 // pred_fallthru
          _
      $region36: #{tpu_custom_call.1} parent=5 // pred_fallthru
        _
    $region6: #{tpu_custom_call.1} parent=1 // loop_footer
      %s15 = sadd.s32 1, %s11
    $region7: #{tpu_custom_call.1} parent=1 // loop_footer_branch
      %10 = sbr.rel target = $region3
    $region8: #{tpu_custom_call.1} parent=1 // loop_exit
      _
    %642 = vsyncpa [#allocation3], 1
    %s643 = scalar_lea.sflag [#allocation3], 1
    %644 = vsyncpa %s643, 1

</llo_original>
